<compile_context>
chip_gen: v5e
topology: v5e:2x2
jax: 0.10.0
libtpu: 0.0.40
codegen_flags: <defaults>
</compile_context>

<pallas_src>
import math
import numpy as np

import jax
import jax.numpy as jnp
from jax.experimental import pallas as pl
from jax.experimental.pallas import tpu as pltpu


# ----------------------------- model dimensions -----------------------------
B = 2              # batch
W = 8              # window size (frames)
N = 32             # points per frame
PC_FEAT = 4        # raw point features (x, y, z, intensity)
PC_IN = 3          # features used by PCEncoder (intensity dropped via zero row)
TRK_FEAT = 8       # raw track features
TRK_IN = 7         # features used by TrackEncoder (last dropped via zero row)
PC_HID = 64        # PCEncoder hidden
PC_OUT = 256       # pc_out
TRK_HID = 64       # TrackEncoder hidden
TRK_OUT = 64       # track_out
F = PC_OUT + TRK_OUT        # encoder_out_size = 320
DEC_HID = 16       # dec_out_size
OUT_W = 128        # lane-dense packed output width

# packed-output column slots
CENTER_C, SIZE_C, ROT_C, SCORE_C = 0, 3, 6, 7

# slab64 (width 64) row offsets
PCW1_R = 0                      # rows 0:4    pc_w1 (row 3 = 0 -> drops intensity)
TRW1_R = 8                      # rows 8:16   tr_w1 (row 15 = 0 -> drops last feat)
TRW2_R = 16                     # rows 16:80  tr_w2
HW1_R = 80                      # rows 80:400 fused heads first layer (320, 64)
BIAS_R = HW1_R + F              # rows 400:408 bias block (pc_b1/tr_b1/tr_b2/h_b1)
W64_ROWS = BIAS_R + 8           # 408
W256_ROWS = 72                  # pc_w2 rows 0:64, pc_b2 row 64
W128_ROWS = 72                  # h_w2 rows 0:64, h_b2 row 64


# ------------------------------ single fused kernel --------------------------
def pctracknet_kernel(pcs_ref, trk_ref, pe_ref, w64_ref, w256_ref, w128_ref,
                      out_ref):
    """Fused PCEncoder + TrackEncoder + pos-enc + mask + DecoderHeads.

    pcs_ref : (B*W*N, 4)  f32
    trk_ref : (B*W, 8)    f32
    pe_ref  : (W, F)      f32 sinusoidal positional encoding
    w64_ref : (408, 64)   packed weights/biases (lane width 64)
    w256_ref: (72, 256)   pc second-layer weight + bias
    w128_ref: (72, 128)   block-diagonal heads second layer + bias
    out_ref : (B*W, 128)  lane-dense packed output
    """
    # ---- static weight slices -------------------------------------------------
    pc_w1 = w64_ref[PCW1_R:PCW1_R + PC_FEAT, :]          # (4, 64)
    tr_w1 = w64_ref[TRW1_R:TRW1_R + TRK_FEAT, :]         # (8, 64)
    tr_w2 = w64_ref[TRW2_R:TRW2_R + TRK_HID, :]          # (64, 64)
    h_w1 = w64_ref[HW1_R:HW1_R + F, :]                   # (320, 64)
    biases = w64_ref[BIAS_R:BIAS_R + 8, :]               # (8, 64)
    pc_b1 = biases[0:1, :]
    tr_b1 = biases[1:2, :]
    tr_b2 = biases[2:3, :]
    h_b1 = biases[3:4, :]

    pc_w2 = w256_ref[0:PC_HID, :]                        # (64, 256)
    pc_b2 = w256_ref[PC_HID:PC_HID + 1, :]               # (1, 256)
    h_w2 = w128_ref[0:4 * DEC_HID, :]                    # (64, 128)
    h_b2 = w128_ref[4 * DEC_HID:4 * DEC_HID + 1, :]      # (1, 128)

    # ---- PCEncoder: shared per-point MLP, max over points ----------------------
    pts = pcs_ref[...]                                   # (B*W*N, 4)
    h1 = jnp.maximum(
        jnp.dot(pts, pc_w1, preferred_element_type=jnp.float32) + pc_b1, 0.0)
    f = jnp.maximum(
        jnp.dot(h1, pc_w2, preferred_element_type=jnp.float32) + pc_b2, 0.0)
    pc_feat = jnp.max(f.reshape(B * W, N, PC_OUT), axis=1)        # (B*W, 256)

    # ---- TrackEncoder + in-kernel padding mask ---------------------------------
    trk = trk_ref[...]                                   # (B*W, 8)
    th = jnp.maximum(
        jnp.dot(trk, tr_w1, preferred_element_type=jnp.float32) + tr_b1, 0.0)
    t_feat = jnp.maximum(
        jnp.dot(th, tr_w2, preferred_element_type=jnp.float32) + tr_b2, 0.0)
    # padding mask: frames whose full 8-feature sum is exactly zero
    keep = jnp.where(jnp.sum(trk, axis=-1, keepdims=True) == 0.0, 0.0, 1.0)

    # ---- concat + positional encoding + mask -----------------------------------
    pe = pe_ref[...]                                     # (W, F)
    pe_b = jnp.broadcast_to(pe[None], (B, W, F)).reshape(B * W, F)
    tp = jnp.concatenate([pc_feat, t_feat], axis=-1)     # (B*W, 320)
    x_pf = (tp + pe_b) * keep                            # (B*W, 320)
    # TODO(synk): PoolTempEnc source unavailable -> temporal encoder 'pool'
    #             treated as identity pass-through.

    # ---- DecoderHeads (all first layers fused; block-diag second layer) --------
    # per-frame heads: center / rotation / score
    h_pf = jnp.maximum(
        jnp.dot(x_pf, h_w1, preferred_element_type=jnp.float32) + h_b1, 0.0)
    res_pf = jnp.dot(h_pf, h_w2, preferred_element_type=jnp.float32) + h_b2

    # size head on window-max-pooled features
    x_pool = jnp.max(x_pf.reshape(B, W, F), axis=1)      # (B, 320)
    h_pool = jnp.maximum(
        jnp.dot(x_pool, h_w1, preferred_element_type=jnp.float32) + h_b1, 0.0)
    res_pool = jnp.dot(h_pool, h_w2, preferred_element_type=jnp.float32) + h_b2
    size_b = jnp.broadcast_to(res_pool[:, None, :], (B, W, OUT_W)).reshape(
        B * W, OUT_W)

    # ---- pack: [center(0:3) | size(3:6) | rot(6) | sigmoid(score)(7) | 0...] ---
    col = jax.lax.broadcasted_iota(jnp.int32, (B * W, OUT_W), 1)
    out = jnp.where(col == SCORE_C, jax.nn.sigmoid(res_pf), res_pf)
    out = jnp.where((col >= SIZE_C) & (col < SIZE_C + 3), size_b, out)
    out_ref[...] = out                                   # single lane-dense store


# ------------------------------ wrapper ---------------------------------------
_VMEM = pl.BlockSpec(memory_space=pltpu.MemorySpace.VMEM)


def _sinusoidal_pe(max_len, d_model):
    position = np.arange(max_len, dtype=np.float32)[:, None]
    div_term = np.exp(np.arange(0, d_model, 2, dtype=np.float32)
                      * (-math.log(10000.0) / d_model))
    pe = np.zeros((max_len, d_model), dtype=np.float32)
    pe[:, 0::2] = np.sin(position * div_term)
    pe[:, 1::2] = np.cos(position * div_term)
    return jnp.asarray(pe)


_PE = _sinusoidal_pe(W, F)                               # (W, F) compile-time const


@jax.jit
def pc_track_net_forward(tracks, pcs, params):
    """tracks: (B, W, 8) f32, pcs: (B, W, N, 4) f32."""
    pcs_flat = pcs.reshape(B * W * N, PC_FEAT)           # free, contiguous reshape
    trk_flat = tracks.reshape(B * W, TRK_FEAT)

    packed = pl.pallas_call(
        pctracknet_kernel,
        out_shape=jax.ShapeDtypeStruct((B * W, OUT_W), jnp.float32),
        in_specs=[_VMEM] * 6,
        out_specs=_VMEM,
    )(pcs_flat, trk_flat, _PE, params['w64'], params['w256'], params['w128'])

    packed = packed.reshape(B, W, OUT_W)
    center = packed[:, :, CENTER_C:CENTER_C + 3]         # (B, W, 3)
    size = packed[:, 0, SIZE_C:SIZE_C + 3]               # (B, 3)
    rotation = packed[:, :, ROT_C:ROT_C + 1]             # (B, W, 1)
    score = packed[:, :, SCORE_C:SCORE_C + 1]            # (B, W, 1)
    return center, size, rotation, score


# ------------------------------ parameter init --------------------------------
def init_params(key):
    ks = jax.random.split(key, 12)

    def lin(k, fan_in, fan_out):
        w = jax.random.normal(k, (fan_in, fan_out), jnp.float32) / math.sqrt(fan_in)
        b = jnp.zeros((fan_out,), jnp.float32)
        return w, b

    pc_w1, pc_b1 = lin(ks[0], PC_IN, PC_HID)
    pc_w2, pc_b2 = lin(ks[1], PC_HID, PC_OUT)
    tr_w1, tr_b1 = lin(ks[2], TRK_IN, TRK_HID)
    tr_w2, tr_b2 = lin(ks[3], TRK_HID, TRK_OUT)
    c_w1, c_b1 = lin(ks[4], F, DEC_HID)
    c_w2, c_b2 = lin(ks[5], DEC_HID, 3)
    s_w1, s_b1 = lin(ks[6], F, DEC_HID)
    s_w2, s_b2 = lin(ks[7], DEC_HID, 3)
    r_w1, r_b1 = lin(ks[8], F, DEC_HID)
    r_w2, r_b2 = lin(ks[9], DEC_HID, 1)
    g_w1, g_b1 = lin(ks[10], F, DEC_HID)
    g_w2, g_b2 = lin(ks[11], DEC_HID, 1)

    # --- slab64 (width 64): first-layer weights + fused heads L1 + biases ------
    w64 = jnp.zeros((W64_ROWS, 64), jnp.float32)
    w64 = w64.at[PCW1_R:PCW1_R + PC_IN, :].set(pc_w1)        # row 3 stays 0
    w64 = w64.at[TRW1_R:TRW1_R + TRK_IN, :].set(tr_w1)       # row 15 stays 0
    w64 = w64.at[TRW2_R:TRW2_R + TRK_HID, :].set(tr_w2)
    h_w1 = jnp.concatenate([c_w1, s_w1, r_w1, g_w1], axis=1)     # (320, 64)
    h_b1 = jnp.concatenate([c_b1, s_b1, r_b1, g_b1], axis=0)     # (64,)
    w64 = w64.at[HW1_R:HW1_R + F, :].set(h_w1)
    w64 = w64.at[BIAS_R + 0, :].set(pc_b1)
    w64 = w64.at[BIAS_R + 1, :].set(tr_b1)
    w64 = w64.at[BIAS_R + 2, :].set(tr_b2)
    w64 = w64.at[BIAS_R + 3, :].set(h_b1)

    # --- slab256 (width 256): PC encoder second layer ---------------------------
    w256 = jnp.zeros((W256_ROWS, 256), jnp.float32)
    w256 = w256.at[0:PC_HID, :].set(pc_w2)
    w256 = w256.at[PC_HID, :].set(pc_b2)

    # --- slab128 (width 128): block-diagonal heads second layer -----------------
    w128 = jnp.zeros((W128_ROWS, 128), jnp.float32)
    w128 = w128.at[0:DEC_HID, CENTER_C:CENTER_C + 3].set(c_w2)
    w128 = w128.at[DEC_HID:2 * DEC_HID, SIZE_C:SIZE_C + 3].set(s_w2)
    w128 = w128.at[2 * DEC_HID:3 * DEC_HID, ROT_C:ROT_C + 1].set(r_w2)
    w128 = w128.at[3 * DEC_HID:4 * DEC_HID, SCORE_C:SCORE_C + 1].set(g_w2)
    h_b2 = jnp.zeros((128,), jnp.float32)
    h_b2 = h_b2.at[CENTER_C:CENTER_C + 3].set(c_b2)
    h_b2 = h_b2.at[SIZE_C:SIZE_C + 3].set(s_b2)
    h_b2 = h_b2.at[ROT_C:ROT_C + 1].set(r_b2)
    h_b2 = h_b2.at[SCORE_C:SCORE_C + 1].set(g_b2)
    w128 = w128.at[4 * DEC_HID, :].set(h_b2)

    return {'w64': w64, 'w256': w256, 'w128': w128}


# ----------------------------------- main --------------------------------------
if __name__ == "__main__":
    key = jax.random.PRNGKey(0)
    k_trk, k_pcs, k_par = jax.random.split(key, 3)

    tracks = jax.random.normal(k_trk, (B, W, 8), jnp.float32)
    pcs = jax.random.normal(k_pcs, (B, W, N, 4), jnp.float32)
    params = init_params(k_par)

    center, size, rotation, score = pc_track_net_forward(tracks, pcs, params)
    jax.block_until_ready((center, size, rotation, score))

    assert center.shape == (B, W, 3)
    assert size.shape == (B, 3)
    assert rotation.shape == (B, W, 1)
    assert score.shape == (B, W, 1)
    assert bool(jnp.all((score >= 0.0) & (score <= 1.0)))
    print("KERNEL_OK")
</pallas_src>

<mosaic_0001>
module attributes {stable_mosaic.version = 11 : i64} {
  func.func @pctracknet_kernel(%arg0: memref<512x4xf32, #tpu.memory_space<vmem>>, %arg1: memref<16x8xf32, #tpu.memory_space<vmem>>, %arg2: memref<8x320xf32, #tpu.memory_space<vmem>>, %arg3: memref<408x64xf32, #tpu.memory_space<vmem>>, %arg4: memref<72x256xf32, #tpu.memory_space<vmem>>, %arg5: memref<72x128xf32, #tpu.memory_space<vmem>>, %arg6: memref<16x128xf32, #tpu.memory_space<vmem>>) attributes {dimension_semantics = [], scalar_prefetch = 0 : i64, scratch_operands = 0 : i64, tpu.core_type = #tpu.core_type<tc>} {
    %c0 = arith.constant 0 : index
    %c0_0 = arith.constant 0 : index
    %0 = vector.load %arg3[%c0, %c0_0] : memref<408x64xf32, #tpu.memory_space<vmem>>, vector<4x64xf32>
    %c8 = arith.constant 8 : index
    %c0_1 = arith.constant 0 : index
    %1 = vector.load %arg3[%c8, %c0_1] : memref<408x64xf32, #tpu.memory_space<vmem>>, vector<8x64xf32>
    %c16 = arith.constant 16 : index
    %c0_2 = arith.constant 0 : index
    %2 = vector.load %arg3[%c16, %c0_2] : memref<408x64xf32, #tpu.memory_space<vmem>>, vector<64x64xf32>
    %c80 = arith.constant 80 : index
    %c0_3 = arith.constant 0 : index
    %3 = vector.load %arg3[%c80, %c0_3] : memref<408x64xf32, #tpu.memory_space<vmem>>, vector<320x64xf32>
    %c400 = arith.constant 400 : index
    %c0_4 = arith.constant 0 : index
    %4 = vector.load %arg3[%c400, %c0_4] : memref<408x64xf32, #tpu.memory_space<vmem>>, vector<8x64xf32>
    %5 = vector.extract_strided_slice %4 {offsets = [0, 0], sizes = [1, 64], strides = [1, 1]} : vector<8x64xf32> to vector<1x64xf32>
    %6 = vector.extract_strided_slice %4 {offsets = [1, 0], sizes = [1, 64], strides = [1, 1]} : vector<8x64xf32> to vector<1x64xf32>
    %7 = vector.extract_strided_slice %4 {offsets = [2, 0], sizes = [1, 64], strides = [1, 1]} : vector<8x64xf32> to vector<1x64xf32>
    %8 = vector.extract_strided_slice %4 {offsets = [3, 0], sizes = [1, 64], strides = [1, 1]} : vector<8x64xf32> to vector<1x64xf32>
    %c0_5 = arith.constant 0 : index
    %c0_6 = arith.constant 0 : index
    %9 = vector.load %arg4[%c0_5, %c0_6] : memref<72x256xf32, #tpu.memory_space<vmem>>, vector<64x256xf32>
    %c64 = arith.constant 64 : index
    %c0_7 = arith.constant 0 : index
    %10 = vector.load %arg4[%c64, %c0_7] : memref<72x256xf32, #tpu.memory_space<vmem>>, vector<1x256xf32>
    %c0_8 = arith.constant 0 : index
    %c0_9 = arith.constant 0 : index
    %11 = vector.load %arg5[%c0_8, %c0_9] : memref<72x128xf32, #tpu.memory_space<vmem>>, vector<64x128xf32>
    %c64_10 = arith.constant 64 : index
    %c0_11 = arith.constant 0 : index
    %12 = vector.load %arg5[%c64_10, %c0_11] : memref<72x128xf32, #tpu.memory_space<vmem>>, vector<1x128xf32>
    %c0_12 = arith.constant 0 : index
    %c0_13 = arith.constant 0 : index
    %13 = vector.load %arg0[%c0_12, %c0_13] : memref<512x4xf32, #tpu.memory_space<vmem>>, vector<512x4xf32>
    %cst = arith.constant dense<0.000000e+00> : vector<512x64xf32>
    %14 = tpu.matmul %13, %0, %cst {dimension_numbers = #tpu.dot_dimension_numbers<[1], [0], [0], [1], [0, 0, 1, 1], [], []>} : vector<512x4xf32>, vector<4x64xf32>, vector<512x64xf32> -> vector<512x64xf32>
    %15 = vector.broadcast %5 : vector<1x64xf32> to vector<512x64xf32>
    %16 = arith.addf %14, %15 : vector<512x64xf32>
    %cst_14 = arith.constant 0.000000e+00 : f32
    %17 = vector.broadcast %cst_14 : f32 to vector<512x64xf32>
    %18 = arith.maximumf %16, %17 : vector<512x64xf32>
    %cst_15 = arith.constant dense<0.000000e+00> : vector<512x256xf32>
    %19 = tpu.matmul %18, %9, %cst_15 {dimension_numbers = #tpu.dot_dimension_numbers<[1], [0], [0], [1], [0, 0, 1, 1], [], []>} : vector<512x64xf32>, vector<64x256xf32>, vector<512x256xf32> -> vector<512x256xf32>
    %20 = vector.broadcast %10 : vector<1x256xf32> to vector<512x256xf32>
    %21 = arith.addf %19, %20 : vector<512x256xf32>
    %cst_16 = arith.constant 0.000000e+00 : f32
    %22 = vector.broadcast %cst_16 : f32 to vector<512x256xf32>
    %23 = arith.maximumf %21, %22 : vector<512x256xf32>
    %24 = vector.shape_cast %23 : vector<512x256xf32> to vector<16x32x256xf32>
    %cst_17 = arith.constant dense<0xFF800000> : vector<16x256xf32>
    %25 = vector.multi_reduction <maximumf>, %24, %cst_17 [1] : vector<16x32x256xf32> to vector<16x256xf32>
    %c0_18 = arith.constant 0 : index
    %c0_19 = arith.constant 0 : index
    %26 = vector.load %arg1[%c0_18, %c0_19] : memref<16x8xf32, #tpu.memory_space<vmem>>, vector<16x8xf32>
    %cst_20 = arith.constant dense<0.000000e+00> : vector<16x64xf32>
    %27 = tpu.matmul %26, %1, %cst_20 {dimension_numbers = #tpu.dot_dimension_numbers<[1], [0], [0], [1], [0, 0, 1, 1], [], []>} : vector<16x8xf32>, vector<8x64xf32>, vector<16x64xf32> -> vector<16x64xf32>
    %28 = vector.broadcast %6 : vector<1x64xf32> to vector<16x64xf32>
    %29 = arith.addf %27, %28 : vector<16x64xf32>
    %cst_21 = arith.constant 0.000000e+00 : f32
    %30 = vector.broadcast %cst_21 : f32 to vector<16x64xf32>
    %31 = arith.maximumf %29, %30 : vector<16x64xf32>
    %cst_22 = arith.constant dense<0.000000e+00> : vector<16x64xf32>
    %32 = tpu.matmul %31, %2, %cst_22 {dimension_numbers = #tpu.dot_dimension_numbers<[1], [0], [0], [1], [0, 0, 1, 1], [], []>} : vector<16x64xf32>, vector<64x64xf32>, vector<16x64xf32> -> vector<16x64xf32>
    %33 = vector.broadcast %7 : vector<1x64xf32> to vector<16x64xf32>
    %34 = arith.addf %32, %33 : vector<16x64xf32>
    %cst_23 = arith.constant 0.000000e+00 : f32
    %35 = vector.broadcast %cst_23 : f32 to vector<16x64xf32>
    %36 = arith.maximumf %34, %35 : vector<16x64xf32>
    %cst_24 = arith.constant dense<0.000000e+00> : vector<16xf32>
    %37 = vector.multi_reduction <add>, %26, %cst_24 [1] : vector<16x8xf32> to vector<16xf32>
    %38 = vector.shape_cast %37 : vector<16xf32> to vector<16x1xf32>
    %cst_25 = arith.constant 0.000000e+00 : f32
    %39 = vector.broadcast %cst_25 : f32 to vector<16x1xf32>
    %40 = arith.cmpf oeq, %38, %39 : vector<16x1xf32>
    %cst_26 = arith.constant 0.000000e+00 : f32
    %cst_27 = arith.constant 1.000000e+00 : f32
    %41 = vector.broadcast %cst_26 : f32 to vector<16x1xf32>
    %42 = vector.broadcast %cst_27 : f32 to vector<16x1xf32>
    %43 = arith.select %40, %41, %42 : vector<16x1xi1>, vector<16x1xf32>
    %c0_28 = arith.constant 0 : index
    %c0_29 = arith.constant 0 : index
    %44 = vector.load %arg2[%c0_28, %c0_29] : memref<8x320xf32, #tpu.memory_space<vmem>>, vector<8x320xf32>
    %45 = vector.shape_cast %44 : vector<8x320xf32> to vector<1x8x320xf32>
    %46 = vector.shape_cast %45 : vector<1x8x320xf32> to vector<1x8x320xf32>
    %47 = vector.broadcast %46 : vector<1x8x320xf32> to vector<2x8x320xf32>
    %48 = vector.shape_cast %47 : vector<2x8x320xf32> to vector<16x320xf32>
    %49 = tpu.concatenate %25, %36 in 1 : vector<16x256xf32>, vector<16x64xf32> -> vector<16x320xf32>
    %50 = arith.addf %49, %48 : vector<16x320xf32>
    %51 = vector.broadcast %43 : vector<16x1xf32> to vector<16x320xf32>
    %52 = arith.mulf %50, %51 : vector<16x320xf32>
    %cst_30 = arith.constant dense<0.000000e+00> : vector<16x64xf32>
    %53 = tpu.matmul %52, %3, %cst_30 {dimension_numbers = #tpu.dot_dimension_numbers<[1], [0], [0], [1], [0, 0, 1, 1], [], []>} : vector<16x320xf32>, vector<320x64xf32>, vector<16x64xf32> -> vector<16x64xf32>
    %54 = vector.broadcast %8 : vector<1x64xf32> to vector<16x64xf32>
    %55 = arith.addf %53, %54 : vector<16x64xf32>
    %cst_31 = arith.constant 0.000000e+00 : f32
    %56 = vector.broadcast %cst_31 : f32 to vector<16x64xf32>
    %57 = arith.maximumf %55, %56 : vector<16x64xf32>
    %cst_32 = arith.constant dense<0.000000e+00> : vector<16x128xf32>
    %58 = tpu.matmul %57, %11, %cst_32 {dimension_numbers = #tpu.dot_dimension_numbers<[1], [0], [0], [1], [0, 0, 1, 1], [], []>} : vector<16x64xf32>, vector<64x128xf32>, vector<16x128xf32> -> vector<16x128xf32>
    %59 = vector.broadcast %12 : vector<1x128xf32> to vector<16x128xf32>
    %60 = arith.addf %58, %59 : vector<16x128xf32>
    %61 = vector.shape_cast %52 : vector<16x320xf32> to vector<2x8x320xf32>
    %cst_33 = arith.constant dense<0xFF800000> : vector<2x320xf32>
    %62 = vector.multi_reduction <maximumf>, %61, %cst_33 [1] : vector<2x8x320xf32> to vector<2x320xf32>
    %cst_34 = arith.constant dense<0.000000e+00> : vector<2x64xf32>
    %63 = tpu.matmul %62, %3, %cst_34 {dimension_numbers = #tpu.dot_dimension_numbers<[1], [0], [0], [1], [0, 0, 1, 1], [], []>} : vector<2x320xf32>, vector<320x64xf32>, vector<2x64xf32> -> vector<2x64xf32>
    %64 = vector.broadcast %8 : vector<1x64xf32> to vector<2x64xf32>
    %65 = arith.addf %63, %64 : vector<2x64xf32>
    %cst_35 = arith.constant 0.000000e+00 : f32
    %66 = vector.broadcast %cst_35 : f32 to vector<2x64xf32>
    %67 = arith.maximumf %65, %66 : vector<2x64xf32>
    %cst_36 = arith.constant dense<0.000000e+00> : vector<2x128xf32>
    %68 = tpu.matmul %67, %11, %cst_36 {dimension_numbers = #tpu.dot_dimension_numbers<[1], [0], [0], [1], [0, 0, 1, 1], [], []>} : vector<2x64xf32>, vector<64x128xf32>, vector<2x128xf32> -> vector<2x128xf32>
    %69 = vector.broadcast %12 : vector<1x128xf32> to vector<2x128xf32>
    %70 = arith.addf %68, %69 : vector<2x128xf32>
    %71 = vector.shape_cast %70 : vector<2x128xf32> to vector<2x1x128xf32>
    %72 = vector.shape_cast %71 : vector<2x1x128xf32> to vector<2x1x128xf32>
    %73 = vector.broadcast %72 : vector<2x1x128xf32> to vector<2x8x128xf32>
    %74 = vector.shape_cast %73 : vector<2x8x128xf32> to vector<16x128xf32>
    %75 = tpu.iota {dimensions = array<i32: 1>} : vector<16x128xi32>
    %c7_i32 = arith.constant 7 : i32
    %76 = vector.broadcast %c7_i32 : i32 to vector<16x128xi32>
    %77 = arith.cmpi eq, %75, %76 : vector<16x128xi32>
    %78 = arith.negf %60 : vector<16x128xf32>
    %79 = math.exp %78 : vector<16x128xf32>
    %cst_37 = arith.constant 1.000000e+00 : f32
    %80 = vector.broadcast %cst_37 : f32 to vector<16x128xf32>
    %81 = arith.addf %80, %79 : vector<16x128xf32>
    %82 = arith.divf %80, %81 : vector<16x128xf32>
    %83 = arith.select %77, %82, %60 : vector<16x128xi1>, vector<16x128xf32>
    %c3_i32 = arith.constant 3 : i32
    %84 = vector.broadcast %c3_i32 : i32 to vector<16x128xi32>
    %85 = arith.cmpi sge, %75, %84 : vector<16x128xi32>
    %c6_i32 = arith.constant 6 : i32
    %86 = vector.broadcast %c6_i32 : i32 to vector<16x128xi32>
    %87 = arith.cmpi slt, %75, %86 : vector<16x128xi32>
    %88 = arith.andi %85, %87 : vector<16x128xi1>
    %89 = arith.select %88, %74, %83 : vector<16x128xi1>, vector<16x128xf32>
    %c0_38 = arith.constant 0 : index
    %c0_39 = arith.constant 0 : index
    %90 = vector.load %arg6[%c0_38, %c0_39] : memref<16x128xf32, #tpu.memory_space<vmem>>, vector<16x128xf32>
    tpu.vector_store %arg6[%c0_38, %c0_39], %89 {strides = array<i32>} : memref<16x128xf32, #tpu.memory_space<vmem>>, vector<16x128xf32>,
    return
  }
}

</mosaic_0001>

<llo_original>
// kernel: pc_track_net_forward.1
$region0: #{pc_track_net_forward.1}
  #allocation0 [shape = 'u32[]', space=smem, size = 0x4, offset = 0x4, fixed_abs, tag = 'smem constant byte address 0x4 - core index']
  #allocation1 [shape = 'u32[72,128]{1,0:T(1,128)}', space=vmem, size = 0x9000, scoped, tag = 'internal scratch']
  %s0 = inlined_call_operand.vmem [shape: f32[512,4], index: 0, kind: input, shape index: {}]
  %s1 = inlined_call_operand.vmem [shape: f32[16,8], index: 1, kind: input, shape index: {}]
  %s2 = inlined_call_operand.vmem [shape: f32[8,320], index: 2, kind: input, shape index: {}]
  %s3 = inlined_call_operand.vmem [shape: f32[408,64], index: 3, kind: input, shape index: {}]
  %s4 = inlined_call_operand.vmem [shape: f32[72,256], index: 4, kind: input, shape index: {}]
  %s5 = inlined_call_operand.vmem [shape: f32[72,128], index: 5, kind: input, shape index: {}]
  %s6 = inlined_call_operand.vmem [shape: f32[16,128], index: 6, kind: output, shape index: {}]
  %s7 = sld [smem:[#allocation0]]
  $region34: #{pc_track_net_forward.1} parent=0
    _
  %s9 = ssub.s32 1, %s7
  %s10 = scalar_select 0, %s9, %s7
  // Predicated region
  $region2: #{pc_track_net_forward.1} parent=0 // pred_check
    _
  $region3: #{pc_track_net_forward.1} parent=0 // pred_check_branch
    %12 = sbr.rel (0) target = $region5
  $region4: #{pc_track_net_forward.1} parent=0 // pred_region
    _
  $region5: #{pc_track_net_forward.1} parent=0 // pred_fallthru
    _
  // Predicated region
  $region6: #{pc_track_net_forward.1} parent=0 // pred_check
    _
  $region7: #{pc_track_net_forward.1} parent=0 // pred_check_branch
    %14 = sbr.rel (0) target = $region9
  $region8: #{pc_track_net_forward.1} parent=0 // pred_region
    _
  $region9: #{pc_track_net_forward.1} parent=0 // pred_fallthru
    _
  // Predicated region
  $region10: #{pc_track_net_forward.1} parent=0 // pred_check
    _
  $region11: #{pc_track_net_forward.1} parent=0 // pred_check_branch
    %16 = sbr.rel (0) target = $region13
  $region12: #{pc_track_net_forward.1} parent=0 // pred_region
    _
  $region13: #{pc_track_net_forward.1} parent=0 // pred_fallthru
    _
  // Predicated region
  $region14: #{pc_track_net_forward.1} parent=0 // pred_check
    _
  $region15: #{pc_track_net_forward.1} parent=0 // pred_check_branch
    %18 = sbr.rel (0) target = $region17
  $region16: #{pc_track_net_forward.1} parent=0 // pred_region
    _
  $region17: #{pc_track_net_forward.1} parent=0 // pred_fallthru
    _
  // Predicated region
  $region18: #{pc_track_net_forward.1} parent=0 // pred_check
    _
  $region19: #{pc_track_net_forward.1} parent=0 // pred_check_branch
    %20 = sbr.rel (0) target = $region21
  $region20: #{pc_track_net_forward.1} parent=0 // pred_region
    _
  $region21: #{pc_track_net_forward.1} parent=0 // pred_fallthru
    _
  // Predicated region
  $region22: #{pc_track_net_forward.1} parent=0 // pred_check
    _
  $region23: #{pc_track_net_forward.1} parent=0 // pred_check_branch
    %22 = sbr.rel (0) target = $region25
  $region24: #{pc_track_net_forward.1} parent=0 // pred_region
    _
  $region25: #{pc_track_net_forward.1} parent=0 // pred_fallthru
    _
  %v23 = vld [vmem:[%s3] sm:$0xf]
  %v24 = vld [vmem:[%s3 + $0x8] sm:$0xff]
  %v25 = vld [vmem:[%s3 + $0x10] sm:$0xff]
  %v26 = vld [vmem:[%s3 + $0x18] sm:$0xff]
  %v27 = vld [vmem:[%s3 + $0x20] sm:$0xff]
  %v28 = vld [vmem:[%s3 + $0x28] sm:$0xff]
  %v29 = vld [vmem:[%s3 + $0x30] sm:$0xff]
  %v30 = vld [vmem:[%s3 + $0x38] sm:$0xff]
  %v31 = vld [vmem:[%s3 + $0x40] sm:$0xff]
  %v32 = vld [vmem:[%s3 + $0x48] sm:$0xff]
  %v33 = vld [vmem:[%s3 + $0x50] sm:$0xff]
  %v34 = vld [vmem:[%s3 + $0x58] sm:$0xff]
  %v35 = vld [vmem:[%s3 + $0x60] sm:$0xff]
  %v36 = vld [vmem:[%s3 + $0x68] sm:$0xff]
  %v37 = vld [vmem:[%s3 + $0x70] sm:$0xff]
  %v38 = vld [vmem:[%s3 + $0x78] sm:$0xff]
  %v39 = vld [vmem:[%s3 + $0x80] sm:$0xff]
  %v40 = vld [vmem:[%s3 + $0x88] sm:$0xff]
  %v41 = vld [vmem:[%s3 + $0x90] sm:$0xff]
  %v42 = vld [vmem:[%s3 + $0x98] sm:$0xff]
  %v43 = vld [vmem:[%s3 + $0xa0] sm:$0xff]
  %v44 = vld [vmem:[%s3 + $0xa8] sm:$0xff]
  %v45 = vld [vmem:[%s3 + $0xb0] sm:$0xff]
  %v46 = vld [vmem:[%s3 + $0xb8] sm:$0xff]
  %v47 = vld [vmem:[%s3 + $0xc0] sm:$0xff]
  %v48 = vld [vmem:[%s3 + $0xc8] sm:$0xff]
  %v49 = vld [vmem:[%s3 + $0xd0] sm:$0xff]
  %v50 = vld [vmem:[%s3 + $0xd8] sm:$0xff]
  %v51 = vld [vmem:[%s3 + $0xe0] sm:$0xff]
  %v52 = vld [vmem:[%s3 + $0xe8] sm:$0xff]
  %v53 = vld [vmem:[%s3 + $0xf0] sm:$0xff]
  %v54 = vld [vmem:[%s3 + $0xf8] sm:$0xff]
  %v55 = vld [vmem:[%s3 + $0x100] sm:$0xff]
  %v56 = vld [vmem:[%s3 + $0x108] sm:$0xff]
  %v57 = vld [vmem:[%s3 + $0x110] sm:$0xff]
  %v58 = vld [vmem:[%s3 + $0x118] sm:$0xff]
  %v59 = vld [vmem:[%s3 + $0x120] sm:$0xff]
  %v60 = vld [vmem:[%s3 + $0x128] sm:$0xff]
  %v61 = vld [vmem:[%s3 + $0x130] sm:$0xff]
  %v62 = vld [vmem:[%s3 + $0x138] sm:$0xff]
  %v63 = vld [vmem:[%s3 + $0x140] sm:$0xff]
  %v64 = vld [vmem:[%s3 + $0x148] sm:$0xff]
  %v65 = vld [vmem:[%s3 + $0x150] sm:$0xff]
  %v66 = vld [vmem:[%s3 + $0x158] sm:$0xff]
  %v67 = vld [vmem:[%s3 + $0x160] sm:$0xff]
  %v68 = vld [vmem:[%s3 + $0x168] sm:$0xff]
  %v69 = vld [vmem:[%s3 + $0x170] sm:$0xff]
  %v70 = vld [vmem:[%s3 + $0x178] sm:$0xff]
  %v71 = vld [vmem:[%s3 + $0x180] sm:$0xff]
  %v72 = vld [vmem:[%s3 + $0x188] sm:$0xff]
  %v73 = vld [vmem:[%s3 + $0x190] sm:$0xff]
  %v74 = vld [vmem:[%s4] sm:$0xff]
  %v75 = vld [vmem:[%s4 + $0x8] sm:$0xff]
  %v76 = vld [vmem:[%s4 + $0x10] sm:$0xff]
  %v77 = vld [vmem:[%s4 + $0x18] sm:$0xff]
  %v78 = vld [vmem:[%s4 + $0x20] sm:$0xff]
  %v79 = vld [vmem:[%s4 + $0x28] sm:$0xff]
  %v80 = vld [vmem:[%s4 + $0x30] sm:$0xff]
  %v81 = vld [vmem:[%s4 + $0x38] sm:$0xff]
  %v82 = vld [vmem:[%s4 + $0x40] sm:$0xff]
  %v83 = vld [vmem:[%s4 + $0x48] sm:$0xff]
  %v84 = vld [vmem:[%s4 + $0x50] sm:$0xff]
  %v85 = vld [vmem:[%s4 + $0x58] sm:$0xff]
  %v86 = vld [vmem:[%s4 + $0x60] sm:$0xff]
  %v87 = vld [vmem:[%s4 + $0x68] sm:$0xff]
  %v88 = vld [vmem:[%s4 + $0x70] sm:$0xff]
  %v89 = vld [vmem:[%s4 + $0x78] sm:$0xff]
  %s90 = scalar_lea.vmem %s4, 128
  %v91 = vld [vmem:[%s90] ss:$8 sm:$0x3]
  %v92 = vld [vmem:[%s5] sm:$0xff]
  %v93 = vld [vmem:[%s5 + $0x8] sm:$0xff]
  %v94 = vld [vmem:[%s5 + $0x10] sm:$0xff]
  %v95 = vld [vmem:[%s5 + $0x18] sm:$0xff]
  %v96 = vld [vmem:[%s5 + $0x20] sm:$0xff]
  %v97 = vld [vmem:[%s5 + $0x28] sm:$0xff]
  %v98 = vld [vmem:[%s5 + $0x30] sm:$0xff]
  %v99 = vld [vmem:[%s5 + $0x38] sm:$0xff]
  %v100 = vld [vmem:[%s5 + $0x40] sm:$0x1]
  %v101 = vld [vmem:[%s0] sm:$0xff]
  %v102 = vld [vmem:[%s0 + $0x8] sm:$0xff]
  %v103 = vld [vmem:[%s0 + $0x10] sm:$0xff]
  %v104 = vld [vmem:[%s0 + $0x18] sm:$0xff]
  %v105 = vld [vmem:[%s0 + $0x20] sm:$0xff]
  %v106 = vld [vmem:[%s0 + $0x28] sm:$0xff]
  %v107 = vld [vmem:[%s0 + $0x30] sm:$0xff]
  %v108 = vld [vmem:[%s0 + $0x38] sm:$0xff]
  %v109 = vld [vmem:[%s0 + $0x40] sm:$0xff]
  %v110 = vld [vmem:[%s0 + $0x48] sm:$0xff]
  %v111 = vld [vmem:[%s0 + $0x50] sm:$0xff]
  %v112 = vld [vmem:[%s0 + $0x58] sm:$0xff]
  %v113 = vld [vmem:[%s0 + $0x60] sm:$0xff]
  %v114 = vld [vmem:[%s0 + $0x68] sm:$0xff]
  %v115 = vld [vmem:[%s0 + $0x70] sm:$0xff]
  %v116 = vld [vmem:[%s0 + $0x78] sm:$0xff]
  %v117 = vld [vmem:[%s0 + $0x80] sm:$0xff]
  %v118 = vld [vmem:[%s0 + $0x88] sm:$0xff]
  %v119 = vld [vmem:[%s0 + $0x90] sm:$0xff]
  %v120 = vld [vmem:[%s0 + $0x98] sm:$0xff]
  %v121 = vld [vmem:[%s0 + $0xa0] sm:$0xff]
  %v122 = vld [vmem:[%s0 + $0xa8] sm:$0xff]
  %v123 = vld [vmem:[%s0 + $0xb0] sm:$0xff]
  %v124 = vld [vmem:[%s0 + $0xb8] sm:$0xff]
  %v125 = vld [vmem:[%s0 + $0xc0] sm:$0xff]
  %v126 = vld [vmem:[%s0 + $0xc8] sm:$0xff]
  %v127 = vld [vmem:[%s0 + $0xd0] sm:$0xff]
  %v128 = vld [vmem:[%s0 + $0xd8] sm:$0xff]
  %v129 = vld [vmem:[%s0 + $0xe0] sm:$0xff]
  %v130 = vld [vmem:[%s0 + $0xe8] sm:$0xff]
  %v131 = vld [vmem:[%s0 + $0xf0] sm:$0xff]
  %v132 = vld [vmem:[%s0 + $0xf8] sm:$0xff]
  %v133 = vld [vmem:[%s0 + $0x100] sm:$0xff]
  %v134 = vld [vmem:[%s0 + $0x108] sm:$0xff]
  %v135 = vld [vmem:[%s0 + $0x110] sm:$0xff]
  %v136 = vld [vmem:[%s0 + $0x118] sm:$0xff]
  %v137 = vld [vmem:[%s0 + $0x120] sm:$0xff]
  %v138 = vld [vmem:[%s0 + $0x128] sm:$0xff]
  %v139 = vld [vmem:[%s0 + $0x130] sm:$0xff]
  %v140 = vld [vmem:[%s0 + $0x138] sm:$0xff]
  %v141 = vld [vmem:[%s0 + $0x140] sm:$0xff]
  %v142 = vld [vmem:[%s0 + $0x148] sm:$0xff]
  %v143 = vld [vmem:[%s0 + $0x150] sm:$0xff]
  %v144 = vld [vmem:[%s0 + $0x158] sm:$0xff]
  %v145 = vld [vmem:[%s0 + $0x160] sm:$0xff]
  %v146 = vld [vmem:[%s0 + $0x168] sm:$0xff]
  %v147 = vld [vmem:[%s0 + $0x170] sm:$0xff]
  %v148 = vld [vmem:[%s0 + $0x178] sm:$0xff]
  %v149 = vld [vmem:[%s0 + $0x180] sm:$0xff]
  %v150 = vld [vmem:[%s0 + $0x188] sm:$0xff]
  %v151 = vld [vmem:[%s0 + $0x190] sm:$0xff]
  %v152 = vld [vmem:[%s0 + $0x198] sm:$0xff]
  %v153 = vld [vmem:[%s0 + $0x1a0] sm:$0xff]
  %v154 = vld [vmem:[%s0 + $0x1a8] sm:$0xff]
  %v155 = vld [vmem:[%s0 + $0x1b0] sm:$0xff]
  %v156 = vld [vmem:[%s0 + $0x1b8] sm:$0xff]
  %v157 = vld [vmem:[%s0 + $0x1c0] sm:$0xff]
  %v158 = vld [vmem:[%s0 + $0x1c8] sm:$0xff]
  %v159 = vld [vmem:[%s0 + $0x1d0] sm:$0xff]
  %v160 = vld [vmem:[%s0 + $0x1d8] sm:$0xff]
  %v161 = vld [vmem:[%s0 + $0x1e0] sm:$0xff]
  %v162 = vld [vmem:[%s0 + $0x1e8] sm:$0xff]
  %v163 = vld [vmem:[%s0 + $0x1f0] sm:$0xff]
  %v164 = vld [vmem:[%s0 + $0x1f8] sm:$0xff]
  %v165 = vperm.slane %v73, 0
  %vm166 = vcmask 31744
  %v168 = vsel %vm166, %v101, 0
  %v171 = vsel %vm166, %v102, 0
  %v174 = vsel %vm166, %v103, 0
  %v177 = vsel %vm166, %v104, 0
  %v180 = vsel %vm166, %v105, 0
  %v183 = vsel %vm166, %v106, 0
  %v186 = vsel %vm166, %v107, 0
  %v189 = vsel %vm166, %v108, 0
  %v192 = vsel %vm166, %v109, 0
  %v195 = vsel %vm166, %v110, 0
  %v198 = vsel %vm166, %v111, 0
  %v201 = vsel %vm166, %v112, 0
  %v204 = vsel %vm166, %v113, 0
  %v207 = vsel %vm166, %v114, 0
  %v210 = vsel %vm166, %v115, 0
  %v213 = vsel %vm166, %v116, 0
  %v216 = vsel %vm166, %v117, 0
  %v219 = vsel %vm166, %v118, 0
  %v222 = vsel %vm166, %v119, 0
  %v225 = vsel %vm166, %v120, 0
  %v228 = vsel %vm166, %v121, 0
  %v231 = vsel %vm166, %v122, 0
  %v234 = vsel %vm166, %v123, 0
  %v237 = vsel %vm166, %v124, 0
  %v240 = vsel %vm166, %v125, 0
  %v243 = vsel %vm166, %v126, 0
  %v246 = vsel %vm166, %v127, 0
  %v249 = vsel %vm166, %v128, 0
  %v252 = vsel %vm166, %v129, 0
  %v255 = vsel %vm166, %v130, 0
  %v258 = vsel %vm166, %v131, 0
  %v261 = vsel %vm166, %v132, 0
  %v264 = vsel %vm166, %v133, 0
  %v267 = vsel %vm166, %v134, 0
  %v270 = vsel %vm166, %v135, 0
  %v273 = vsel %vm166, %v136, 0
  %v276 = vsel %vm166, %v137, 0
  %v279 = vsel %vm166, %v138, 0
  %v282 = vsel %vm166, %v139, 0
  %v285 = vsel %vm166, %v140, 0
  %v288 = vsel %vm166, %v141, 0
  %v291 = vsel %vm166, %v142, 0
  %v294 = vsel %vm166, %v143, 0
  %v297 = vsel %vm166, %v144, 0
  %v300 = vsel %vm166, %v145, 0
  %v303 = vsel %vm166, %v146, 0
  %v306 = vsel %vm166, %v147, 0
  %v309 = vsel %vm166, %v148, 0
  %v312 = vsel %vm166, %v149, 0
  %v315 = vsel %vm166, %v150, 0
  %v318 = vsel %vm166, %v151, 0
  %v321 = vsel %vm166, %v152, 0
  %v324 = vsel %vm166, %v153, 0
  %v327 = vsel %vm166, %v154, 0
  %v330 = vsel %vm166, %v155, 0
  %v333 = vsel %vm166, %v156, 0
  %v336 = vsel %vm166, %v157, 0
  %v339 = vsel %vm166, %v158, 0
  %v342 = vsel %vm166, %v159, 0
  %v345 = vsel %vm166, %v160, 0
  %v348 = vsel %vm166, %v161, 0
  %v351 = vsel %vm166, %v162, 0
  %v354 = vsel %vm166, %v163, 0
  %v357 = vsel %vm166, %v164, 0
  %vm359 = vcmask 1043456
  %v361 = vsel %vm359, %v23, 0
  %363 = vmatpush.msra.mxu0 0.0
  %364 = vmatpush.msra.mxu0 0.0
  %365 = vmatpush.msra.mxu0 0.0
  %366 = vmatpush.msra.mxu0 0.0
  %367 = vmatpush.msra.mxu0 0.0
  %368 = vmatpush.msra.mxu0 0.0
  %369 = vmatpush.msra.mxu0 0.0
  %370 = vmatpush.msra.mxu0 0.0
  %371 = vmatpush.msra.mxu0 0.0
  %372 = vmatpush.msra.mxu0 0.0
  %373 = vmatpush.msra.mxu0 0.0
  %374 = vmatpush.msra.mxu0 0.0
  %375 = vmatpush.msra.mxu0 0.0
  %376 = vmatpush.msra.mxu0 0.0
  %377 = vmatpush.msra.mxu0 0.0
  %378 = vmatpush.msra.mxu0 %v361
  %379 = vmatmul.f32.gmra.mxu0 %v168
  %v380 = vpop.f32.mrf.mxu0
  %v381 = vadd.f32 %v165, %v380
  %382 = vmatmul.f32.gmra.mxu0 %v171
  %v383 = vpop.f32.mrf.mxu0
  %v384 = vadd.f32 %v165, %v383
  %385 = vmatmul.f32.gmra.mxu0 %v174
  %v386 = vpop.f32.mrf.mxu0
  %v387 = vadd.f32 %v165, %v386
  %388 = vmatmul.f32.gmra.mxu0 %v177
  %v389 = vpop.f32.mrf.mxu0
  %v390 = vadd.f32 %v165, %v389
  %391 = vmatmul.f32.gmra.mxu0 %v180
  %v392 = vpop.f32.mrf.mxu0
  %v393 = vadd.f32 %v165, %v392
  %394 = vmatmul.f32.gmra.mxu0 %v183
  %v395 = vpop.f32.mrf.mxu0
  %v396 = vadd.f32 %v165, %v395
  %397 = vmatmul.f32.gmra.mxu0 %v186
  %v398 = vpop.f32.mrf.mxu0
  %v399 = vadd.f32 %v165, %v398
  %400 = vmatmul.f32.gmra.mxu0 %v189
  %v401 = vpop.f32.mrf.mxu0
  %v402 = vadd.f32 %v165, %v401
  %403 = vmatmul.f32.gmra.mxu0 %v192
  %v404 = vpop.f32.mrf.mxu0
  %v405 = vadd.f32 %v165, %v404
  %406 = vmatmul.f32.gmra.mxu0 %v195
  %v407 = vpop.f32.mrf.mxu0
  %v408 = vadd.f32 %v165, %v407
  %409 = vmatmul.f32.gmra.mxu0 %v198
  %v410 = vpop.f32.mrf.mxu0
  %v411 = vadd.f32 %v165, %v410
  %412 = vmatmul.f32.gmra.mxu0 %v201
  %v413 = vpop.f32.mrf.mxu0
  %v414 = vadd.f32 %v165, %v413
  %415 = vmatmul.f32.gmra.mxu0 %v204
  %v416 = vpop.f32.mrf.mxu0
  %v417 = vadd.f32 %v165, %v416
  %418 = vmatmul.f32.gmra.mxu0 %v207
  %v419 = vpop.f32.mrf.mxu0
  %v420 = vadd.f32 %v165, %v419
  %421 = vmatmul.f32.gmra.mxu0 %v210
  %v422 = vpop.f32.mrf.mxu0
  %v423 = vadd.f32 %v165, %v422
  %424 = vmatmul.f32.gmra.mxu0 %v213
  %v425 = vpop.f32.mrf.mxu0
  %v426 = vadd.f32 %v165, %v425
  %427 = vmatmul.f32.gmra.mxu0 %v216
  %v428 = vpop.f32.mrf.mxu0
  %v429 = vadd.f32 %v165, %v428
  %430 = vmatmul.f32.gmra.mxu0 %v219
  %v431 = vpop.f32.mrf.mxu0
  %v432 = vadd.f32 %v165, %v431
  %433 = vmatmul.f32.gmra.mxu0 %v222
  %v434 = vpop.f32.mrf.mxu0
  %v435 = vadd.f32 %v165, %v434
  %436 = vmatmul.f32.gmra.mxu0 %v225
  %v437 = vpop.f32.mrf.mxu0
  %v438 = vadd.f32 %v165, %v437
  %439 = vmatmul.f32.gmra.mxu0 %v228
  %v440 = vpop.f32.mrf.mxu0
  %v441 = vadd.f32 %v165, %v440
  %442 = vmatmul.f32.gmra.mxu0 %v231
  %v443 = vpop.f32.mrf.mxu0
  %v444 = vadd.f32 %v165, %v443
  %445 = vmatmul.f32.gmra.mxu0 %v234
  %v446 = vpop.f32.mrf.mxu0
  %v447 = vadd.f32 %v165, %v446
  %448 = vmatmul.f32.gmra.mxu0 %v237
  %v449 = vpop.f32.mrf.mxu0
  %v450 = vadd.f32 %v165, %v449
  %451 = vmatmul.f32.gmra.mxu0 %v240
  %v452 = vpop.f32.mrf.mxu0
  %v453 = vadd.f32 %v165, %v452
  %454 = vmatmul.f32.gmra.mxu0 %v243
  %v455 = vpop.f32.mrf.mxu0
  %v456 = vadd.f32 %v165, %v455
  %457 = vmatmul.f32.gmra.mxu0 %v246
  %v458 = vpop.f32.mrf.mxu0
  %v459 = vadd.f32 %v165, %v458
  %460 = vmatmul.f32.gmra.mxu0 %v249
  %v461 = vpop.f32.mrf.mxu0
  %v462 = vadd.f32 %v165, %v461
  %463 = vmatmul.f32.gmra.mxu0 %v252
  %v464 = vpop.f32.mrf.mxu0
  %v465 = vadd.f32 %v165, %v464
  %466 = vmatmul.f32.gmra.mxu0 %v255
  %v467 = vpop.f32.mrf.mxu0
  %v468 = vadd.f32 %v165, %v467
  %469 = vmatmul.f32.gmra.mxu0 %v258
  %v470 = vpop.f32.mrf.mxu0
  %v471 = vadd.f32 %v165, %v470
  %472 = vmatmul.f32.gmra.mxu0 %v261
  %v473 = vpop.f32.mrf.mxu0
  %v474 = vadd.f32 %v165, %v473
  %475 = vmatmul.f32.gmra.mxu0 %v264
  %v476 = vpop.f32.mrf.mxu0
  %v477 = vadd.f32 %v165, %v476
  %478 = vmatmul.f32.gmra.mxu0 %v267
  %v479 = vpop.f32.mrf.mxu0
  %v480 = vadd.f32 %v165, %v479
  %481 = vmatmul.f32.gmra.mxu0 %v270
  %v482 = vpop.f32.mrf.mxu0
  %v483 = vadd.f32 %v165, %v482
  %484 = vmatmul.f32.gmra.mxu0 %v273
  %v485 = vpop.f32.mrf.mxu0
  %v486 = vadd.f32 %v165, %v485
  %487 = vmatmul.f32.gmra.mxu0 %v276
  %v488 = vpop.f32.mrf.mxu0
  %v489 = vadd.f32 %v165, %v488
  %490 = vmatmul.f32.gmra.mxu0 %v279
  %v491 = vpop.f32.mrf.mxu0
  %v492 = vadd.f32 %v165, %v491
  %493 = vmatmul.f32.gmra.mxu0 %v282
  %v494 = vpop.f32.mrf.mxu0
  %v495 = vadd.f32 %v165, %v494
  %496 = vmatmul.f32.gmra.mxu0 %v285
  %v497 = vpop.f32.mrf.mxu0
  %v498 = vadd.f32 %v165, %v497
  %499 = vmatmul.f32.gmra.mxu0 %v288
  %v500 = vpop.f32.mrf.mxu0
  %v501 = vadd.f32 %v165, %v500
  %502 = vmatmul.f32.gmra.mxu0 %v291
  %v503 = vpop.f32.mrf.mxu0
  %v504 = vadd.f32 %v165, %v503
  %505 = vmatmul.f32.gmra.mxu0 %v294
  %v506 = vpop.f32.mrf.mxu0
  %v507 = vadd.f32 %v165, %v506
  %508 = vmatmul.f32.gmra.mxu0 %v297
  %v509 = vpop.f32.mrf.mxu0
  %v510 = vadd.f32 %v165, %v509
  %511 = vmatmul.f32.gmra.mxu0 %v300
  %v512 = vpop.f32.mrf.mxu0
  %v513 = vadd.f32 %v165, %v512
  %514 = vmatmul.f32.gmra.mxu0 %v303
  %v515 = vpop.f32.mrf.mxu0
  %v516 = vadd.f32 %v165, %v515
  %517 = vmatmul.f32.gmra.mxu0 %v306
  %v518 = vpop.f32.mrf.mxu0
  %v519 = vadd.f32 %v165, %v518
  %520 = vmatmul.f32.gmra.mxu0 %v309
  %v521 = vpop.f32.mrf.mxu0
  %v522 = vadd.f32 %v165, %v521
  %523 = vmatmul.f32.gmra.mxu0 %v312
  %v524 = vpop.f32.mrf.mxu0
  %v525 = vadd.f32 %v165, %v524
  %526 = vmatmul.f32.gmra.mxu0 %v315
  %v527 = vpop.f32.mrf.mxu0
  %v528 = vadd.f32 %v165, %v527
  %529 = vmatmul.f32.gmra.mxu0 %v318
  %v530 = vpop.f32.mrf.mxu0
  %v531 = vadd.f32 %v165, %v530
  %532 = vmatmul.f32.gmra.mxu0 %v321
  %v533 = vpop.f32.mrf.mxu0
  %v534 = vadd.f32 %v165, %v533
  %535 = vmatmul.f32.gmra.mxu0 %v324
  %v536 = vpop.f32.mrf.mxu0
  %v537 = vadd.f32 %v165, %v536
  %538 = vmatmul.f32.gmra.mxu0 %v327
  %v539 = vpop.f32.mrf.mxu0
  %v540 = vadd.f32 %v165, %v539
  %541 = vmatmul.f32.gmra.mxu0 %v330
  %v542 = vpop.f32.mrf.mxu0
  %v543 = vadd.f32 %v165, %v542
  %544 = vmatmul.f32.gmra.mxu0 %v333
  %v545 = vpop.f32.mrf.mxu0
  %v546 = vadd.f32 %v165, %v545
  %547 = vmatmul.f32.gmra.mxu0 %v336
  %v548 = vpop.f32.mrf.mxu0
  %v549 = vadd.f32 %v165, %v548
  %550 = vmatmul.f32.gmra.mxu0 %v339
  %v551 = vpop.f32.mrf.mxu0
  %v552 = vadd.f32 %v165, %v551
  %553 = vmatmul.f32.gmra.mxu0 %v342
  %v554 = vpop.f32.mrf.mxu0
  %v555 = vadd.f32 %v165, %v554
  %556 = vmatmul.f32.gmra.mxu0 %v345
  %v557 = vpop.f32.mrf.mxu0
  %v558 = vadd.f32 %v165, %v557
  %559 = vmatmul.f32.gmra.mxu0 %v348
  %v560 = vpop.f32.mrf.mxu0
  %v561 = vadd.f32 %v165, %v560
  %562 = vmatmul.f32.gmra.mxu0 %v351
  %v563 = vpop.f32.mrf.mxu0
  %v564 = vadd.f32 %v165, %v563
  %565 = vmatmul.f32.gmra.mxu0 %v354
  %v566 = vpop.f32.mrf.mxu0
  %v567 = vadd.f32 %v165, %v566
  %568 = vmatmul.f32.gmra.mxu0 %v357
  %v569 = vpop.f32.mrf.mxu0
  %v570 = vadd.f32 %v165, %v569
  %571 = vdwg.mxu0
  %v572 = vmax.f32 %v381, 0.0
  %v573 = vmax.f32 %v384, 0.0
  %v574 = vmax.f32 %v387, 0.0
  %v575 = vmax.f32 %v390, 0.0
  %v576 = vmax.f32 %v393, 0.0
  %v577 = vmax.f32 %v396, 0.0
  %v578 = vmax.f32 %v399, 0.0
  %v579 = vmax.f32 %v402, 0.0
  %v580 = vmax.f32 %v405, 0.0
  %v581 = vmax.f32 %v408, 0.0
  %v582 = vmax.f32 %v411, 0.0
  %v583 = vmax.f32 %v414, 0.0
  %v584 = vmax.f32 %v417, 0.0
  %v585 = vmax.f32 %v420, 0.0
  %v586 = vmax.f32 %v423, 0.0
  %v587 = vmax.f32 %v426, 0.0
  %v588 = vmax.f32 %v429, 0.0
  %v589 = vmax.f32 %v432, 0.0
  %v590 = vmax.f32 %v435, 0.0
  %v591 = vmax.f32 %v438, 0.0
  %v592 = vmax.f32 %v441, 0.0
  %v593 = vmax.f32 %v444, 0.0
  %v594 = vmax.f32 %v447, 0.0
  %v595 = vmax.f32 %v450, 0.0
  %v596 = vmax.f32 %v453, 0.0
  %v597 = vmax.f32 %v456, 0.0
  %v598 = vmax.f32 %v459, 0.0
  %v599 = vmax.f32 %v462, 0.0
  %v600 = vmax.f32 %v465, 0.0
  %v601 = vmax.f32 %v468, 0.0
  %v602 = vmax.f32 %v471, 0.0
  %v603 = vmax.f32 %v474, 0.0
  %v604 = vmax.f32 %v477, 0.0
  %v605 = vmax.f32 %v480, 0.0
  %v606 = vmax.f32 %v483, 0.0
  %v607 = vmax.f32 %v486, 0.0
  %v608 = vmax.f32 %v489, 0.0
  %v609 = vmax.f32 %v492, 0.0
  %v610 = vmax.f32 %v495, 0.0
  %v611 = vmax.f32 %v498, 0.0
  %v612 = vmax.f32 %v501, 0.0
  %v613 = vmax.f32 %v504, 0.0
  %v614 = vmax.f32 %v507, 0.0
  %v615 = vmax.f32 %v510, 0.0
  %v616 = vmax.f32 %v513, 0.0
  %v617 = vmax.f32 %v516, 0.0
  %v618 = vmax.f32 %v519, 0.0
  %v619 = vmax.f32 %v522, 0.0
  %v620 = vmax.f32 %v525, 0.0
  %v621 = vmax.f32 %v528, 0.0
  %v622 = vmax.f32 %v531, 0.0
  %v623 = vmax.f32 %v534, 0.0
  %v624 = vmax.f32 %v537, 0.0
  %v625 = vmax.f32 %v540, 0.0
  %v626 = vmax.f32 %v543, 0.0
  %v627 = vmax.f32 %v546, 0.0
  %v628 = vmax.f32 %v549, 0.0
  %v629 = vmax.f32 %v552, 0.0
  %v630 = vmax.f32 %v555, 0.0
  %v631 = vmax.f32 %v558, 0.0
  %v632 = vmax.f32 %v561, 0.0
  %v633 = vmax.f32 %v564, 0.0
  %v634 = vmax.f32 %v567, 0.0
  %v635 = vmax.f32 %v570, 0.0
  %v637 = vperm.slane %v91, 0
  %v638 = vperm.slane %v91, 1
  %vm641 = vcmask 523264
  %v643 = vsel %vm641, %v572, 0
  %v646 = vsel %vm641, %v573, 0
  %v649 = vsel %vm641, %v574, 0
  %v652 = vsel %vm641, %v575, 0
  %v655 = vsel %vm641, %v576, 0
  %v658 = vsel %vm641, %v577, 0
  %v661 = vsel %vm641, %v578, 0
  %v664 = vsel %vm641, %v579, 0
  %v667 = vsel %vm641, %v580, 0
  %v670 = vsel %vm641, %v581, 0
  %v673 = vsel %vm641, %v582, 0
  %v676 = vsel %vm641, %v583, 0
  %v679 = vsel %vm641, %v584, 0
  %v682 = vsel %vm641, %v585, 0
  %v685 = vsel %vm641, %v586, 0
  %v688 = vsel %vm641, %v587, 0
  %v691 = vsel %vm641, %v588, 0
  %v694 = vsel %vm641, %v589, 0
  %v697 = vsel %vm641, %v590, 0
  %v700 = vsel %vm641, %v591, 0
  %v703 = vsel %vm641, %v592, 0
  %v706 = vsel %vm641, %v593, 0
  %v709 = vsel %vm641, %v594, 0
  %v712 = vsel %vm641, %v595, 0
  %v715 = vsel %vm641, %v596, 0
  %v718 = vsel %vm641, %v597, 0
  %v721 = vsel %vm641, %v598, 0
  %v724 = vsel %vm641, %v599, 0
  %v727 = vsel %vm641, %v600, 0
  %v730 = vsel %vm641, %v601, 0
  %v733 = vsel %vm641, %v602, 0
  %v736 = vsel %vm641, %v603, 0
  %v739 = vsel %vm641, %v604, 0
  %v742 = vsel %vm641, %v605, 0
  %v745 = vsel %vm641, %v606, 0
  %v748 = vsel %vm641, %v607, 0
  %v751 = vsel %vm641, %v608, 0
  %v754 = vsel %vm641, %v609, 0
  %v757 = vsel %vm641, %v610, 0
  %v760 = vsel %vm641, %v611, 0
  %v763 = vsel %vm641, %v612, 0
  %v766 = vsel %vm641, %v613, 0
  %v769 = vsel %vm641, %v614, 0
  %v772 = vsel %vm641, %v615, 0
  %v775 = vsel %vm641, %v616, 0
  %v778 = vsel %vm641, %v617, 0
  %v781 = vsel %vm641, %v618, 0
  %v784 = vsel %vm641, %v619, 0
  %v787 = vsel %vm641, %v620, 0
  %v790 = vsel %vm641, %v621, 0
  %v793 = vsel %vm641, %v622, 0
  %v796 = vsel %vm641, %v623, 0
  %v799 = vsel %vm641, %v624, 0
  %v802 = vsel %vm641, %v625, 0
  %v805 = vsel %vm641, %v626, 0
  %v808 = vsel %vm641, %v627, 0
  %v811 = vsel %vm641, %v628, 0
  %v814 = vsel %vm641, %v629, 0
  %v817 = vsel %vm641, %v630, 0
  %v820 = vsel %vm641, %v631, 0
  %v823 = vsel %vm641, %v632, 0
  %v826 = vsel %vm641, %v633, 0
  %v829 = vsel %vm641, %v634, 0
  %v832 = vsel %vm641, %v635, 0
  %834 = vmatpush.msra.mxu0 0.0
  %835 = vmatpush.msra.mxu0 0.0
  %836 = vmatpush.msra.mxu0 0.0
  %837 = vmatpush.msra.mxu0 0.0
  %838 = vmatpush.msra.mxu0 0.0
  %839 = vmatpush.msra.mxu0 0.0
  %840 = vmatpush.msra.mxu0 0.0
  %841 = vmatpush.msra.mxu0 0.0
  %842 = vmatpush.msra.mxu0 %v88
  %843 = vmatpush.msra.mxu0 %v86
  %844 = vmatpush.msra.mxu0 %v84
  %845 = vmatpush.msra.mxu0 %v82
  %846 = vmatpush.msra.mxu0 %v80
  %847 = vmatpush.msra.mxu0 %v78
  %848 = vmatpush.msra.mxu0 %v76
  %849 = vmatpush.msra.mxu0 %v74
  %850 = vmatmul.f32.gmra.mxu0 %v643
  %v851 = vpop.f32.mrf.mxu0
  %v852 = vadd.f32 %v637, %v851
  %853 = vmatmul.f32.gmra.mxu0 %v646
  %v854 = vpop.f32.mrf.mxu0
  %v855 = vadd.f32 %v637, %v854
  %856 = vmatmul.f32.gmra.mxu0 %v649
  %v857 = vpop.f32.mrf.mxu0
  %v858 = vadd.f32 %v637, %v857
  %859 = vmatmul.f32.gmra.mxu0 %v652
  %v860 = vpop.f32.mrf.mxu0
  %v861 = vadd.f32 %v637, %v860
  %862 = vmatmul.f32.gmra.mxu0 %v655
  %v863 = vpop.f32.mrf.mxu0
  %v864 = vadd.f32 %v637, %v863
  %865 = vmatmul.f32.gmra.mxu0 %v658
  %v866 = vpop.f32.mrf.mxu0
  %v867 = vadd.f32 %v637, %v866
  %868 = vmatmul.f32.gmra.mxu0 %v661
  %v869 = vpop.f32.mrf.mxu0
  %v870 = vadd.f32 %v637, %v869
  %871 = vmatmul.f32.gmra.mxu0 %v664
  %v872 = vpop.f32.mrf.mxu0
  %v873 = vadd.f32 %v637, %v872
  %874 = vmatmul.f32.gmra.mxu0 %v667
  %v875 = vpop.f32.mrf.mxu0
  %v876 = vadd.f32 %v637, %v875
  %877 = vmatmul.f32.gmra.mxu0 %v670
  %v878 = vpop.f32.mrf.mxu0
  %v879 = vadd.f32 %v637, %v878
  %880 = vmatmul.f32.gmra.mxu0 %v673
  %v881 = vpop.f32.mrf.mxu0
  %v882 = vadd.f32 %v637, %v881
  %883 = vmatmul.f32.gmra.mxu0 %v676
  %v884 = vpop.f32.mrf.mxu0
  %v885 = vadd.f32 %v637, %v884
  %886 = vmatmul.f32.gmra.mxu0 %v679
  %v887 = vpop.f32.mrf.mxu0
  %v888 = vadd.f32 %v637, %v887
  %889 = vmatmul.f32.gmra.mxu0 %v682
  %v890 = vpop.f32.mrf.mxu0
  %v891 = vadd.f32 %v637, %v890
  %892 = vmatmul.f32.gmra.mxu0 %v685
  %v893 = vpop.f32.mrf.mxu0
  %v894 = vadd.f32 %v637, %v893
  %895 = vmatmul.f32.gmra.mxu0 %v688
  %v896 = vpop.f32.mrf.mxu0
  %v897 = vadd.f32 %v637, %v896
  %898 = vmatmul.f32.gmra.mxu0 %v691
  %v899 = vpop.f32.mrf.mxu0
  %v900 = vadd.f32 %v637, %v899
  %901 = vmatmul.f32.gmra.mxu0 %v694
  %v902 = vpop.f32.mrf.mxu0
  %v903 = vadd.f32 %v637, %v902
  %904 = vmatmul.f32.gmra.mxu0 %v697
  %v905 = vpop.f32.mrf.mxu0
  %v906 = vadd.f32 %v637, %v905
  %907 = vmatmul.f32.gmra.mxu0 %v700
  %v908 = vpop.f32.mrf.mxu0
  %v909 = vadd.f32 %v637, %v908
  %910 = vmatmul.f32.gmra.mxu0 %v703
  %v911 = vpop.f32.mrf.mxu0
  %v912 = vadd.f32 %v637, %v911
  %913 = vmatmul.f32.gmra.mxu0 %v706
  %v914 = vpop.f32.mrf.mxu0
  %v915 = vadd.f32 %v637, %v914
  %916 = vmatmul.f32.gmra.mxu0 %v709
  %v917 = vpop.f32.mrf.mxu0
  %v918 = vadd.f32 %v637, %v917
  %919 = vmatmul.f32.gmra.mxu0 %v712
  %v920 = vpop.f32.mrf.mxu0
  %v921 = vadd.f32 %v637, %v920
  %922 = vmatmul.f32.gmra.mxu0 %v715
  %v923 = vpop.f32.mrf.mxu0
  %v924 = vadd.f32 %v637, %v923
  %925 = vmatmul.f32.gmra.mxu0 %v718
  %v926 = vpop.f32.mrf.mxu0
  %v927 = vadd.f32 %v637, %v926
  %928 = vmatmul.f32.gmra.mxu0 %v721
  %v929 = vpop.f32.mrf.mxu0
  %v930 = vadd.f32 %v637, %v929
  %931 = vmatmul.f32.gmra.mxu0 %v724
  %v932 = vpop.f32.mrf.mxu0
  %v933 = vadd.f32 %v637, %v932
  %934 = vmatmul.f32.gmra.mxu0 %v727
  %v935 = vpop.f32.mrf.mxu0
  %v936 = vadd.f32 %v637, %v935
  %937 = vmatmul.f32.gmra.mxu0 %v730
  %v938 = vpop.f32.mrf.mxu0
  %v939 = vadd.f32 %v637, %v938
  %940 = vmatmul.f32.gmra.mxu0 %v733
  %v941 = vpop.f32.mrf.mxu0
  %v942 = vadd.f32 %v637, %v941
  %943 = vmatmul.f32.gmra.mxu0 %v736
  %v944 = vpop.f32.mrf.mxu0
  %v945 = vadd.f32 %v637, %v944
  %946 = vmatmul.f32.gmra.mxu0 %v739
  %v947 = vpop.f32.mrf.mxu0
  %v948 = vadd.f32 %v637, %v947
  %949 = vmatmul.f32.gmra.mxu0 %v742
  %v950 = vpop.f32.mrf.mxu0
  %v951 = vadd.f32 %v637, %v950
  %952 = vmatmul.f32.gmra.mxu0 %v745
  %v953 = vpop.f32.mrf.mxu0
  %v954 = vadd.f32 %v637, %v953
  %955 = vmatmul.f32.gmra.mxu0 %v748
  %v956 = vpop.f32.mrf.mxu0
  %v957 = vadd.f32 %v637, %v956
  %958 = vmatmul.f32.gmra.mxu0 %v751
  %v959 = vpop.f32.mrf.mxu0
  %v960 = vadd.f32 %v637, %v959
  %961 = vmatmul.f32.gmra.mxu0 %v754
  %v962 = vpop.f32.mrf.mxu0
  %v963 = vadd.f32 %v637, %v962
  %964 = vmatmul.f32.gmra.mxu0 %v757
  %v965 = vpop.f32.mrf.mxu0
  %v966 = vadd.f32 %v637, %v965
  %967 = vmatmul.f32.gmra.mxu0 %v760
  %v968 = vpop.f32.mrf.mxu0
  %v969 = vadd.f32 %v637, %v968
  %970 = vmatmul.f32.gmra.mxu0 %v763
  %v971 = vpop.f32.mrf.mxu0
  %v972 = vadd.f32 %v637, %v971
  %973 = vmatmul.f32.gmra.mxu0 %v766
  %v974 = vpop.f32.mrf.mxu0
  %v975 = vadd.f32 %v637, %v974
  %976 = vmatmul.f32.gmra.mxu0 %v769
  %v977 = vpop.f32.mrf.mxu0
  %v978 = vadd.f32 %v637, %v977
  %979 = vmatmul.f32.gmra.mxu0 %v772
  %v980 = vpop.f32.mrf.mxu0
  %v981 = vadd.f32 %v637, %v980
  %982 = vmatmul.f32.gmra.mxu0 %v775
  %v983 = vpop.f32.mrf.mxu0
  %v984 = vadd.f32 %v637, %v983
  %985 = vmatmul.f32.gmra.mxu0 %v778
  %v986 = vpop.f32.mrf.mxu0
  %v987 = vadd.f32 %v637, %v986
  %988 = vmatmul.f32.gmra.mxu0 %v781
  %v989 = vpop.f32.mrf.mxu0
  %v990 = vadd.f32 %v637, %v989
  %991 = vmatmul.f32.gmra.mxu0 %v784
  %v992 = vpop.f32.mrf.mxu0
  %v993 = vadd.f32 %v637, %v992
  %994 = vmatmul.f32.gmra.mxu0 %v787
  %v995 = vpop.f32.mrf.mxu0
  %v996 = vadd.f32 %v637, %v995
  %997 = vmatmul.f32.gmra.mxu0 %v790
  %v998 = vpop.f32.mrf.mxu0
  %v999 = vadd.f32 %v637, %v998
  %1000 = vmatmul.f32.gmra.mxu0 %v793
  %v1001 = vpop.f32.mrf.mxu0
  %v1002 = vadd.f32 %v637, %v1001
  %1003 = vmatmul.f32.gmra.mxu0 %v796
  %v1004 = vpop.f32.mrf.mxu0
  %v1005 = vadd.f32 %v637, %v1004
  %1006 = vmatmul.f32.gmra.mxu0 %v799
  %v1007 = vpop.f32.mrf.mxu0
  %v1008 = vadd.f32 %v637, %v1007
  %1009 = vmatmul.f32.gmra.mxu0 %v802
  %v1010 = vpop.f32.mrf.mxu0
  %v1011 = vadd.f32 %v637, %v1010
  %1012 = vmatmul.f32.gmra.mxu0 %v805
  %v1013 = vpop.f32.mrf.mxu0
  %v1014 = vadd.f32 %v637, %v1013
  %1015 = vmatmul.f32.gmra.mxu0 %v808
  %v1016 = vpop.f32.mrf.mxu0
  %v1017 = vadd.f32 %v637, %v1016
  %1018 = vmatmul.f32.gmra.mxu0 %v811
  %v1019 = vpop.f32.mrf.mxu0
  %v1020 = vadd.f32 %v637, %v1019
  %1021 = vmatmul.f32.gmra.mxu0 %v814
  %v1022 = vpop.f32.mrf.mxu0
  %v1023 = vadd.f32 %v637, %v1022
  %1024 = vmatmul.f32.gmra.mxu0 %v817
  %v1025 = vpop.f32.mrf.mxu0
  %v1026 = vadd.f32 %v637, %v1025
  %1027 = vmatmul.f32.gmra.mxu0 %v820
  %v1028 = vpop.f32.mrf.mxu0
  %v1029 = vadd.f32 %v637, %v1028
  %1030 = vmatmul.f32.gmra.mxu0 %v823
  %v1031 = vpop.f32.mrf.mxu0
  %v1032 = vadd.f32 %v637, %v1031
  %1033 = vmatmul.f32.gmra.mxu0 %v826
  %v1034 = vpop.f32.mrf.mxu0
  %v1035 = vadd.f32 %v637, %v1034
  %1036 = vmatmul.f32.gmra.mxu0 %v829
  %v1037 = vpop.f32.mrf.mxu0
  %v1038 = vadd.f32 %v637, %v1037
  %1039 = vmatmul.f32.gmra.mxu0 %v832
  %v1040 = vpop.f32.mrf.mxu0
  %v1041 = vadd.f32 %v637, %v1040
  %1042 = vdwg.mxu0
  %1043 = vmatpush.msra.mxu0 0.0
  %1044 = vmatpush.msra.mxu0 0.0
  %1045 = vmatpush.msra.mxu0 0.0
  %1046 = vmatpush.msra.mxu0 0.0
  %1047 = vmatpush.msra.mxu0 0.0
  %1048 = vmatpush.msra.mxu0 0.0
  %1049 = vmatpush.msra.mxu0 0.0
  %1050 = vmatpush.msra.mxu0 0.0
  %1051 = vmatpush.msra.mxu0 %v89
  %1052 = vmatpush.msra.mxu0 %v87
  %1053 = vmatpush.msra.mxu0 %v85
  %1054 = vmatpush.msra.mxu0 %v83
  %1055 = vmatpush.msra.mxu0 %v81
  %1056 = vmatpush.msra.mxu0 %v79
  %1057 = vmatpush.msra.mxu0 %v77
  %1058 = vmatpush.msra.mxu0 %v75
  %1059 = vmatmul.f32.gmra.mxu0 %v643
  %v1060 = vpop.f32.mrf.mxu0
  %v1061 = vadd.f32 %v638, %v1060
  %1062 = vmatmul.f32.gmra.mxu0 %v646
  %v1063 = vpop.f32.mrf.mxu0
  %v1064 = vadd.f32 %v638, %v1063
  %1065 = vmatmul.f32.gmra.mxu0 %v649
  %v1066 = vpop.f32.mrf.mxu0
  %v1067 = vadd.f32 %v638, %v1066
  %1068 = vmatmul.f32.gmra.mxu0 %v652
  %v1069 = vpop.f32.mrf.mxu0
  %v1070 = vadd.f32 %v638, %v1069
  %1071 = vmatmul.f32.gmra.mxu0 %v655
  %v1072 = vpop.f32.mrf.mxu0
  %v1073 = vadd.f32 %v638, %v1072
  %1074 = vmatmul.f32.gmra.mxu0 %v658
  %v1075 = vpop.f32.mrf.mxu0
  %v1076 = vadd.f32 %v638, %v1075
  %1077 = vmatmul.f32.gmra.mxu0 %v661
  %v1078 = vpop.f32.mrf.mxu0
  %v1079 = vadd.f32 %v638, %v1078
  %1080 = vmatmul.f32.gmra.mxu0 %v664
  %v1081 = vpop.f32.mrf.mxu0
  %v1082 = vadd.f32 %v638, %v1081
  %1083 = vmatmul.f32.gmra.mxu0 %v667
  %v1084 = vpop.f32.mrf.mxu0
  %v1085 = vadd.f32 %v638, %v1084
  %1086 = vmatmul.f32.gmra.mxu0 %v670
  %v1087 = vpop.f32.mrf.mxu0
  %v1088 = vadd.f32 %v638, %v1087
  %1089 = vmatmul.f32.gmra.mxu0 %v673
  %v1090 = vpop.f32.mrf.mxu0
  %v1091 = vadd.f32 %v638, %v1090
  %1092 = vmatmul.f32.gmra.mxu0 %v676
  %v1093 = vpop.f32.mrf.mxu0
  %v1094 = vadd.f32 %v638, %v1093
  %1095 = vmatmul.f32.gmra.mxu0 %v679
  %v1096 = vpop.f32.mrf.mxu0
  %v1097 = vadd.f32 %v638, %v1096
  %1098 = vmatmul.f32.gmra.mxu0 %v682
  %v1099 = vpop.f32.mrf.mxu0
  %v1100 = vadd.f32 %v638, %v1099
  %1101 = vmatmul.f32.gmra.mxu0 %v685
  %v1102 = vpop.f32.mrf.mxu0
  %v1103 = vadd.f32 %v638, %v1102
  %1104 = vmatmul.f32.gmra.mxu0 %v688
  %v1105 = vpop.f32.mrf.mxu0
  %v1106 = vadd.f32 %v638, %v1105
  %1107 = vmatmul.f32.gmra.mxu0 %v691
  %v1108 = vpop.f32.mrf.mxu0
  %v1109 = vadd.f32 %v638, %v1108
  %1110 = vmatmul.f32.gmra.mxu0 %v694
  %v1111 = vpop.f32.mrf.mxu0
  %v1112 = vadd.f32 %v638, %v1111
  %1113 = vmatmul.f32.gmra.mxu0 %v697
  %v1114 = vpop.f32.mrf.mxu0
  %v1115 = vadd.f32 %v638, %v1114
  %1116 = vmatmul.f32.gmra.mxu0 %v700
  %v1117 = vpop.f32.mrf.mxu0
  %v1118 = vadd.f32 %v638, %v1117
  %1119 = vmatmul.f32.gmra.mxu0 %v703
  %v1120 = vpop.f32.mrf.mxu0
  %v1121 = vadd.f32 %v638, %v1120
  %1122 = vmatmul.f32.gmra.mxu0 %v706
  %v1123 = vpop.f32.mrf.mxu0
  %v1124 = vadd.f32 %v638, %v1123
  %1125 = vmatmul.f32.gmra.mxu0 %v709
  %v1126 = vpop.f32.mrf.mxu0
  %v1127 = vadd.f32 %v638, %v1126
  %1128 = vmatmul.f32.gmra.mxu0 %v712
  %v1129 = vpop.f32.mrf.mxu0
  %v1130 = vadd.f32 %v638, %v1129
  %1131 = vmatmul.f32.gmra.mxu0 %v715
  %v1132 = vpop.f32.mrf.mxu0
  %v1133 = vadd.f32 %v638, %v1132
  %1134 = vmatmul.f32.gmra.mxu0 %v718
  %v1135 = vpop.f32.mrf.mxu0
  %v1136 = vadd.f32 %v638, %v1135
  %1137 = vmatmul.f32.gmra.mxu0 %v721
  %v1138 = vpop.f32.mrf.mxu0
  %v1139 = vadd.f32 %v638, %v1138
  %1140 = vmatmul.f32.gmra.mxu0 %v724
  %v1141 = vpop.f32.mrf.mxu0
  %v1142 = vadd.f32 %v638, %v1141
  %1143 = vmatmul.f32.gmra.mxu0 %v727
  %v1144 = vpop.f32.mrf.mxu0
  %v1145 = vadd.f32 %v638, %v1144
  %1146 = vmatmul.f32.gmra.mxu0 %v730
  %v1147 = vpop.f32.mrf.mxu0
  %v1148 = vadd.f32 %v638, %v1147
  %1149 = vmatmul.f32.gmra.mxu0 %v733
  %v1150 = vpop.f32.mrf.mxu0
  %v1151 = vadd.f32 %v638, %v1150
  %1152 = vmatmul.f32.gmra.mxu0 %v736
  %v1153 = vpop.f32.mrf.mxu0
  %v1154 = vadd.f32 %v638, %v1153
  %1155 = vmatmul.f32.gmra.mxu0 %v739
  %v1156 = vpop.f32.mrf.mxu0
  %v1157 = vadd.f32 %v638, %v1156
  %1158 = vmatmul.f32.gmra.mxu0 %v742
  %v1159 = vpop.f32.mrf.mxu0
  %v1160 = vadd.f32 %v638, %v1159
  %1161 = vmatmul.f32.gmra.mxu0 %v745
  %v1162 = vpop.f32.mrf.mxu0
  %v1163 = vadd.f32 %v638, %v1162
  %1164 = vmatmul.f32.gmra.mxu0 %v748
  %v1165 = vpop.f32.mrf.mxu0
  %v1166 = vadd.f32 %v638, %v1165
  %1167 = vmatmul.f32.gmra.mxu0 %v751
  %v1168 = vpop.f32.mrf.mxu0
  %v1169 = vadd.f32 %v638, %v1168
  %1170 = vmatmul.f32.gmra.mxu0 %v754
  %v1171 = vpop.f32.mrf.mxu0
  %v1172 = vadd.f32 %v638, %v1171
  %1173 = vmatmul.f32.gmra.mxu0 %v757
  %v1174 = vpop.f32.mrf.mxu0
  %v1175 = vadd.f32 %v638, %v1174
  %1176 = vmatmul.f32.gmra.mxu0 %v760
  %v1177 = vpop.f32.mrf.mxu0
  %v1178 = vadd.f32 %v638, %v1177
  %1179 = vmatmul.f32.gmra.mxu0 %v763
  %v1180 = vpop.f32.mrf.mxu0
  %v1181 = vadd.f32 %v638, %v1180
  %1182 = vmatmul.f32.gmra.mxu0 %v766
  %v1183 = vpop.f32.mrf.mxu0
  %v1184 = vadd.f32 %v638, %v1183
  %1185 = vmatmul.f32.gmra.mxu0 %v769
  %v1186 = vpop.f32.mrf.mxu0
  %v1187 = vadd.f32 %v638, %v1186
  %1188 = vmatmul.f32.gmra.mxu0 %v772
  %v1189 = vpop.f32.mrf.mxu0
  %v1190 = vadd.f32 %v638, %v1189
  %1191 = vmatmul.f32.gmra.mxu0 %v775
  %v1192 = vpop.f32.mrf.mxu0
  %v1193 = vadd.f32 %v638, %v1192
  %1194 = vmatmul.f32.gmra.mxu0 %v778
  %v1195 = vpop.f32.mrf.mxu0
  %v1196 = vadd.f32 %v638, %v1195
  %1197 = vmatmul.f32.gmra.mxu0 %v781
  %v1198 = vpop.f32.mrf.mxu0
  %v1199 = vadd.f32 %v638, %v1198
  %1200 = vmatmul.f32.gmra.mxu0 %v784
  %v1201 = vpop.f32.mrf.mxu0
  %v1202 = vadd.f32 %v638, %v1201
  %1203 = vmatmul.f32.gmra.mxu0 %v787
  %v1204 = vpop.f32.mrf.mxu0
  %v1205 = vadd.f32 %v638, %v1204
  %1206 = vmatmul.f32.gmra.mxu0 %v790
  %v1207 = vpop.f32.mrf.mxu0
  %v1208 = vadd.f32 %v638, %v1207
  %1209 = vmatmul.f32.gmra.mxu0 %v793
  %v1210 = vpop.f32.mrf.mxu0
  %v1211 = vadd.f32 %v638, %v1210
  %1212 = vmatmul.f32.gmra.mxu0 %v796
  %v1213 = vpop.f32.mrf.mxu0
  %v1214 = vadd.f32 %v638, %v1213
  %1215 = vmatmul.f32.gmra.mxu0 %v799
  %v1216 = vpop.f32.mrf.mxu0
  %v1217 = vadd.f32 %v638, %v1216
  %1218 = vmatmul.f32.gmra.mxu0 %v802
  %v1219 = vpop.f32.mrf.mxu0
  %v1220 = vadd.f32 %v638, %v1219
  %1221 = vmatmul.f32.gmra.mxu0 %v805
  %v1222 = vpop.f32.mrf.mxu0
  %v1223 = vadd.f32 %v638, %v1222
  %1224 = vmatmul.f32.gmra.mxu0 %v808
  %v1225 = vpop.f32.mrf.mxu0
  %v1226 = vadd.f32 %v638, %v1225
  %1227 = vmatmul.f32.gmra.mxu0 %v811
  %v1228 = vpop.f32.mrf.mxu0
  %v1229 = vadd.f32 %v638, %v1228
  %1230 = vmatmul.f32.gmra.mxu0 %v814
  %v1231 = vpop.f32.mrf.mxu0
  %v1232 = vadd.f32 %v638, %v1231
  %1233 = vmatmul.f32.gmra.mxu0 %v817
  %v1234 = vpop.f32.mrf.mxu0
  %v1235 = vadd.f32 %v638, %v1234
  %1236 = vmatmul.f32.gmra.mxu0 %v820
  %v1237 = vpop.f32.mrf.mxu0
  %v1238 = vadd.f32 %v638, %v1237
  %1239 = vmatmul.f32.gmra.mxu0 %v823
  %v1240 = vpop.f32.mrf.mxu0
  %v1241 = vadd.f32 %v638, %v1240
  %1242 = vmatmul.f32.gmra.mxu0 %v826
  %v1243 = vpop.f32.mrf.mxu0
  %v1244 = vadd.f32 %v638, %v1243
  %1245 = vmatmul.f32.gmra.mxu0 %v829
  %v1246 = vpop.f32.mrf.mxu0
  %v1247 = vadd.f32 %v638, %v1246
  %1248 = vmatmul.f32.gmra.mxu0 %v832
  %v1249 = vpop.f32.mrf.mxu0
  %v1250 = vadd.f32 %v638, %v1249
  %1251 = vdwg.mxu0
  %v1252 = vmax.f32 %v852, 0.0
  %v1253 = vmax.f32 %v1061, 0.0
  %v1254 = vmax.f32 %v855, 0.0
  %v1255 = vmax.f32 %v1064, 0.0
  %v1256 = vmax.f32 %v858, 0.0
  %v1257 = vmax.f32 %v1067, 0.0
  %v1258 = vmax.f32 %v861, 0.0
  %v1259 = vmax.f32 %v1070, 0.0
  %v1260 = vmax.f32 %v864, 0.0
  %v1261 = vmax.f32 %v1073, 0.0
  %v1262 = vmax.f32 %v867, 0.0
  %v1263 = vmax.f32 %v1076, 0.0
  %v1264 = vmax.f32 %v870, 0.0
  %v1265 = vmax.f32 %v1079, 0.0
  %v1266 = vmax.f32 %v873, 0.0
  %v1267 = vmax.f32 %v1082, 0.0
  %v1268 = vmax.f32 %v876, 0.0
  %v1269 = vmax.f32 %v1085, 0.0
  %v1270 = vmax.f32 %v879, 0.0
  %v1271 = vmax.f32 %v1088, 0.0
  %v1272 = vmax.f32 %v882, 0.0
  %v1273 = vmax.f32 %v1091, 0.0
  %v1274 = vmax.f32 %v885, 0.0
  %v1275 = vmax.f32 %v1094, 0.0
  %v1276 = vmax.f32 %v888, 0.0
  %v1277 = vmax.f32 %v1097, 0.0
  %v1278 = vmax.f32 %v891, 0.0
  %v1279 = vmax.f32 %v1100, 0.0
  %v1280 = vmax.f32 %v894, 0.0
  %v1281 = vmax.f32 %v1103, 0.0
  %v1282 = vmax.f32 %v897, 0.0
  %v1283 = vmax.f32 %v1106, 0.0
  %v1284 = vmax.f32 %v900, 0.0
  %v1285 = vmax.f32 %v1109, 0.0
  %v1286 = vmax.f32 %v903, 0.0
  %v1287 = vmax.f32 %v1112, 0.0
  %v1288 = vmax.f32 %v906, 0.0
  %v1289 = vmax.f32 %v1115, 0.0
  %v1290 = vmax.f32 %v909, 0.0
  %v1291 = vmax.f32 %v1118, 0.0
  %v1292 = vmax.f32 %v912, 0.0
  %v1293 = vmax.f32 %v1121, 0.0
  %v1294 = vmax.f32 %v915, 0.0
  %v1295 = vmax.f32 %v1124, 0.0
  %v1296 = vmax.f32 %v918, 0.0
  %v1297 = vmax.f32 %v1127, 0.0
  %v1298 = vmax.f32 %v921, 0.0
  %v1299 = vmax.f32 %v1130, 0.0
  %v1300 = vmax.f32 %v924, 0.0
  %v1301 = vmax.f32 %v1133, 0.0
  %v1302 = vmax.f32 %v927, 0.0
  %v1303 = vmax.f32 %v1136, 0.0
  %v1304 = vmax.f32 %v930, 0.0
  %v1305 = vmax.f32 %v1139, 0.0
  %v1306 = vmax.f32 %v933, 0.0
  %v1307 = vmax.f32 %v1142, 0.0
  %v1308 = vmax.f32 %v936, 0.0
  %v1309 = vmax.f32 %v1145, 0.0
  %v1310 = vmax.f32 %v939, 0.0
  %v1311 = vmax.f32 %v1148, 0.0
  %v1312 = vmax.f32 %v942, 0.0
  %v1313 = vmax.f32 %v1151, 0.0
  %v1314 = vmax.f32 %v945, 0.0
  %v1315 = vmax.f32 %v1154, 0.0
  %v1316 = vmax.f32 %v948, 0.0
  %v1317 = vmax.f32 %v1157, 0.0
  %v1318 = vmax.f32 %v951, 0.0
  %v1319 = vmax.f32 %v1160, 0.0
  %v1320 = vmax.f32 %v954, 0.0
  %v1321 = vmax.f32 %v1163, 0.0
  %v1322 = vmax.f32 %v957, 0.0
  %v1323 = vmax.f32 %v1166, 0.0
  %v1324 = vmax.f32 %v960, 0.0
  %v1325 = vmax.f32 %v1169, 0.0
  %v1326 = vmax.f32 %v963, 0.0
  %v1327 = vmax.f32 %v1172, 0.0
  %v1328 = vmax.f32 %v966, 0.0
  %v1329 = vmax.f32 %v1175, 0.0
  %v1330 = vmax.f32 %v969, 0.0
  %v1331 = vmax.f32 %v1178, 0.0
  %v1332 = vmax.f32 %v972, 0.0
  %v1333 = vmax.f32 %v1181, 0.0
  %v1334 = vmax.f32 %v975, 0.0
  %v1335 = vmax.f32 %v1184, 0.0
  %v1336 = vmax.f32 %v978, 0.0
  %v1337 = vmax.f32 %v1187, 0.0
  %v1338 = vmax.f32 %v981, 0.0
  %v1339 = vmax.f32 %v1190, 0.0
  %v1340 = vmax.f32 %v984, 0.0
  %v1341 = vmax.f32 %v1193, 0.0
  %v1342 = vmax.f32 %v987, 0.0
  %v1343 = vmax.f32 %v1196, 0.0
  %v1344 = vmax.f32 %v990, 0.0
  %v1345 = vmax.f32 %v1199, 0.0
  %v1346 = vmax.f32 %v993, 0.0
  %v1347 = vmax.f32 %v1202, 0.0
  %v1348 = vmax.f32 %v996, 0.0
  %v1349 = vmax.f32 %v1205, 0.0
  %v1350 = vmax.f32 %v999, 0.0
  %v1351 = vmax.f32 %v1208, 0.0
  %v1352 = vmax.f32 %v1002, 0.0
  %v1353 = vmax.f32 %v1211, 0.0
  %v1354 = vmax.f32 %v1005, 0.0
  %v1355 = vmax.f32 %v1214, 0.0
  %v1356 = vmax.f32 %v1008, 0.0
  %v1357 = vmax.f32 %v1217, 0.0
  %v1358 = vmax.f32 %v1011, 0.0
  %v1359 = vmax.f32 %v1220, 0.0
  %v1360 = vmax.f32 %v1014, 0.0
  %v1361 = vmax.f32 %v1223, 0.0
  %v1362 = vmax.f32 %v1017, 0.0
  %v1363 = vmax.f32 %v1226, 0.0
  %v1364 = vmax.f32 %v1020, 0.0
  %v1365 = vmax.f32 %v1229, 0.0
  %v1366 = vmax.f32 %v1023, 0.0
  %v1367 = vmax.f32 %v1232, 0.0
  %v1368 = vmax.f32 %v1026, 0.0
  %v1369 = vmax.f32 %v1235, 0.0
  %v1370 = vmax.f32 %v1029, 0.0
  %v1371 = vmax.f32 %v1238, 0.0
  %v1372 = vmax.f32 %v1032, 0.0
  %v1373 = vmax.f32 %v1241, 0.0
  %v1374 = vmax.f32 %v1035, 0.0
  %v1375 = vmax.f32 %v1244, 0.0
  %v1376 = vmax.f32 %v1038, 0.0
  %v1377 = vmax.f32 %v1247, 0.0
  %v1378 = vmax.f32 %v1041, 0.0
  %v1379 = vmax.f32 %v1250, 0.0
  %v1380 = vmax.f32 %v1252, %v1254
  %v1381 = vmax.f32 %v1380, %v1256
  %v1382 = vmax.f32 %v1381, %v1258
  %v1383 = vrot.slane %v1382, 4
  %v1384 = vmax.f32 %v1382, %v1383
  %v1385 = vrot.slane %v1384, 2
  %v1386 = vmax.f32 %v1384, %v1385
  %v1387 = vrot.slane %v1386, 1
  %v1388 = vmax.f32 %v1386, %v1387
  %v1389 = vmax.f32 %v1253, %v1255
  %v1390 = vmax.f32 %v1389, %v1257
  %v1391 = vmax.f32 %v1390, %v1259
  %v1392 = vrot.slane %v1391, 4
  %v1393 = vmax.f32 %v1391, %v1392
  %v1394 = vrot.slane %v1393, 2
  %v1395 = vmax.f32 %v1393, %v1394
  %v1396 = vrot.slane %v1395, 1
  %v1397 = vmax.f32 %v1395, %v1396
  %v1398 = vmax.f32 %v1260, %v1262
  %v1399 = vmax.f32 %v1398, %v1264
  %v1400 = vmax.f32 %v1399, %v1266
  %v1401 = vrot.slane %v1400, 4
  %v1402 = vmax.f32 %v1400, %v1401
  %v1403 = vrot.slane %v1402, 2
  %v1404 = vmax.f32 %v1402, %v1403
  %v1405 = vrot.slane %v1404, 1
  %v1406 = vmax.f32 %v1404, %v1405
  %v1407 = vmax.f32 %v1261, %v1263
  %v1408 = vmax.f32 %v1407, %v1265
  %v1409 = vmax.f32 %v1408, %v1267
  %v1410 = vrot.slane %v1409, 4
  %v1411 = vmax.f32 %v1409, %v1410
  %v1412 = vrot.slane %v1411, 2
  %v1413 = vmax.f32 %v1411, %v1412
  %v1414 = vrot.slane %v1413, 1
  %v1415 = vmax.f32 %v1413, %v1414
  %v1416 = vmax.f32 %v1268, %v1270
  %v1417 = vmax.f32 %v1416, %v1272
  %v1418 = vmax.f32 %v1417, %v1274
  %v1419 = vrot.slane %v1418, 4
  %v1420 = vmax.f32 %v1418, %v1419
  %v1421 = vrot.slane %v1420, 2
  %v1422 = vmax.f32 %v1420, %v1421
  %v1423 = vrot.slane %v1422, 1
  %v1424 = vmax.f32 %v1422, %v1423
  %v1425 = vmax.f32 %v1269, %v1271
  %v1426 = vmax.f32 %v1425, %v1273
  %v1427 = vmax.f32 %v1426, %v1275
  %v1428 = vrot.slane %v1427, 4
  %v1429 = vmax.f32 %v1427, %v1428
  %v1430 = vrot.slane %v1429, 2
  %v1431 = vmax.f32 %v1429, %v1430
  %v1432 = vrot.slane %v1431, 1
  %v1433 = vmax.f32 %v1431, %v1432
  %v1434 = vmax.f32 %v1276, %v1278
  %v1435 = vmax.f32 %v1434, %v1280
  %v1436 = vmax.f32 %v1435, %v1282
  %v1437 = vrot.slane %v1436, 4
  %v1438 = vmax.f32 %v1436, %v1437
  %v1439 = vrot.slane %v1438, 2
  %v1440 = vmax.f32 %v1438, %v1439
  %v1441 = vrot.slane %v1440, 1
  %v1442 = vmax.f32 %v1440, %v1441
  %v1443 = vmax.f32 %v1277, %v1279
  %v1444 = vmax.f32 %v1443, %v1281
  %v1445 = vmax.f32 %v1444, %v1283
  %v1446 = vrot.slane %v1445, 4
  %v1447 = vmax.f32 %v1445, %v1446
  %v1448 = vrot.slane %v1447, 2
  %v1449 = vmax.f32 %v1447, %v1448
  %v1450 = vrot.slane %v1449, 1
  %v1451 = vmax.f32 %v1449, %v1450
  %v1452 = vmax.f32 %v1284, %v1286
  %v1453 = vmax.f32 %v1452, %v1288
  %v1454 = vmax.f32 %v1453, %v1290
  %v1455 = vrot.slane %v1454, 4
  %v1456 = vmax.f32 %v1454, %v1455
  %v1457 = vrot.slane %v1456, 2
  %v1458 = vmax.f32 %v1456, %v1457
  %v1459 = vrot.slane %v1458, 1
  %v1460 = vmax.f32 %v1458, %v1459
  %v1461 = vmax.f32 %v1285, %v1287
  %v1462 = vmax.f32 %v1461, %v1289
  %v1463 = vmax.f32 %v1462, %v1291
  %v1464 = vrot.slane %v1463, 4
  %v1465 = vmax.f32 %v1463, %v1464
  %v1466 = vrot.slane %v1465, 2
  %v1467 = vmax.f32 %v1465, %v1466
  %v1468 = vrot.slane %v1467, 1
  %v1469 = vmax.f32 %v1467, %v1468
  %v1470 = vmax.f32 %v1292, %v1294
  %v1471 = vmax.f32 %v1470, %v1296
  %v1472 = vmax.f32 %v1471, %v1298
  %v1473 = vrot.slane %v1472, 4
  %v1474 = vmax.f32 %v1472, %v1473
  %v1475 = vrot.slane %v1474, 2
  %v1476 = vmax.f32 %v1474, %v1475
  %v1477 = vrot.slane %v1476, 1
  %v1478 = vmax.f32 %v1476, %v1477
  %v1479 = vmax.f32 %v1293, %v1295
  %v1480 = vmax.f32 %v1479, %v1297
  %v1481 = vmax.f32 %v1480, %v1299
  %v1482 = vrot.slane %v1481, 4
  %v1483 = vmax.f32 %v1481, %v1482
  %v1484 = vrot.slane %v1483, 2
  %v1485 = vmax.f32 %v1483, %v1484
  %v1486 = vrot.slane %v1485, 1
  %v1487 = vmax.f32 %v1485, %v1486
  %v1488 = vmax.f32 %v1300, %v1302
  %v1489 = vmax.f32 %v1488, %v1304
  %v1490 = vmax.f32 %v1489, %v1306
  %v1491 = vrot.slane %v1490, 4
  %v1492 = vmax.f32 %v1490, %v1491
  %v1493 = vrot.slane %v1492, 2
  %v1494 = vmax.f32 %v1492, %v1493
  %v1495 = vrot.slane %v1494, 1
  %v1496 = vmax.f32 %v1494, %v1495
  %v1497 = vmax.f32 %v1301, %v1303
  %v1498 = vmax.f32 %v1497, %v1305
  %v1499 = vmax.f32 %v1498, %v1307
  %v1500 = vrot.slane %v1499, 4
  %v1501 = vmax.f32 %v1499, %v1500
  %v1502 = vrot.slane %v1501, 2
  %v1503 = vmax.f32 %v1501, %v1502
  %v1504 = vrot.slane %v1503, 1
  %v1505 = vmax.f32 %v1503, %v1504
  %v1506 = vmax.f32 %v1308, %v1310
  %v1507 = vmax.f32 %v1506, %v1312
  %v1508 = vmax.f32 %v1507, %v1314
  %v1509 = vrot.slane %v1508, 4
  %v1510 = vmax.f32 %v1508, %v1509
  %v1511 = vrot.slane %v1510, 2
  %v1512 = vmax.f32 %v1510, %v1511
  %v1513 = vrot.slane %v1512, 1
  %v1514 = vmax.f32 %v1512, %v1513
  %v1515 = vmax.f32 %v1309, %v1311
  %v1516 = vmax.f32 %v1515, %v1313
  %v1517 = vmax.f32 %v1516, %v1315
  %v1518 = vrot.slane %v1517, 4
  %v1519 = vmax.f32 %v1517, %v1518
  %v1520 = vrot.slane %v1519, 2
  %v1521 = vmax.f32 %v1519, %v1520
  %v1522 = vrot.slane %v1521, 1
  %v1523 = vmax.f32 %v1521, %v1522
  %v1524 = vmax.f32 %v1316, %v1318
  %v1525 = vmax.f32 %v1524, %v1320
  %v1526 = vmax.f32 %v1525, %v1322
  %v1527 = vrot.slane %v1526, 4
  %v1528 = vmax.f32 %v1526, %v1527
  %v1529 = vrot.slane %v1528, 2
  %v1530 = vmax.f32 %v1528, %v1529
  %v1531 = vrot.slane %v1530, 1
  %v1532 = vmax.f32 %v1530, %v1531
  %v1533 = vmax.f32 %v1317, %v1319
  %v1534 = vmax.f32 %v1533, %v1321
  %v1535 = vmax.f32 %v1534, %v1323
  %v1536 = vrot.slane %v1535, 4
  %v1537 = vmax.f32 %v1535, %v1536
  %v1538 = vrot.slane %v1537, 2
  %v1539 = vmax.f32 %v1537, %v1538
  %v1540 = vrot.slane %v1539, 1
  %v1541 = vmax.f32 %v1539, %v1540
  %v1542 = vmax.f32 %v1324, %v1326
  %v1543 = vmax.f32 %v1542, %v1328
  %v1544 = vmax.f32 %v1543, %v1330
  %v1545 = vrot.slane %v1544, 4
  %v1546 = vmax.f32 %v1544, %v1545
  %v1547 = vrot.slane %v1546, 2
  %v1548 = vmax.f32 %v1546, %v1547
  %v1549 = vrot.slane %v1548, 1
  %v1550 = vmax.f32 %v1548, %v1549
  %v1551 = vmax.f32 %v1325, %v1327
  %v1552 = vmax.f32 %v1551, %v1329
  %v1553 = vmax.f32 %v1552, %v1331
  %v1554 = vrot.slane %v1553, 4
  %v1555 = vmax.f32 %v1553, %v1554
  %v1556 = vrot.slane %v1555, 2
  %v1557 = vmax.f32 %v1555, %v1556
  %v1558 = vrot.slane %v1557, 1
  %v1559 = vmax.f32 %v1557, %v1558
  %v1560 = vmax.f32 %v1332, %v1334
  %v1561 = vmax.f32 %v1560, %v1336
  %v1562 = vmax.f32 %v1561, %v1338
  %v1563 = vrot.slane %v1562, 4
  %v1564 = vmax.f32 %v1562, %v1563
  %v1565 = vrot.slane %v1564, 2
  %v1566 = vmax.f32 %v1564, %v1565
  %v1567 = vrot.slane %v1566, 1
  %v1568 = vmax.f32 %v1566, %v1567
  %v1569 = vmax.f32 %v1333, %v1335
  %v1570 = vmax.f32 %v1569, %v1337
  %v1571 = vmax.f32 %v1570, %v1339
  %v1572 = vrot.slane %v1571, 4
  %v1573 = vmax.f32 %v1571, %v1572
  %v1574 = vrot.slane %v1573, 2
  %v1575 = vmax.f32 %v1573, %v1574
  %v1576 = vrot.slane %v1575, 1
  %v1577 = vmax.f32 %v1575, %v1576
  %v1578 = vmax.f32 %v1340, %v1342
  %v1579 = vmax.f32 %v1578, %v1344
  %v1580 = vmax.f32 %v1579, %v1346
  %v1581 = vrot.slane %v1580, 4
  %v1582 = vmax.f32 %v1580, %v1581
  %v1583 = vrot.slane %v1582, 2
  %v1584 = vmax.f32 %v1582, %v1583
  %v1585 = vrot.slane %v1584, 1
  %v1586 = vmax.f32 %v1584, %v1585
  %v1587 = vmax.f32 %v1341, %v1343
  %v1588 = vmax.f32 %v1587, %v1345
  %v1589 = vmax.f32 %v1588, %v1347
  %v1590 = vrot.slane %v1589, 4
  %v1591 = vmax.f32 %v1589, %v1590
  %v1592 = vrot.slane %v1591, 2
  %v1593 = vmax.f32 %v1591, %v1592
  %v1594 = vrot.slane %v1593, 1
  %v1595 = vmax.f32 %v1593, %v1594
  %v1596 = vmax.f32 %v1348, %v1350
  %v1597 = vmax.f32 %v1596, %v1352
  %v1598 = vmax.f32 %v1597, %v1354
  %v1599 = vrot.slane %v1598, 4
  %v1600 = vmax.f32 %v1598, %v1599
  %v1601 = vrot.slane %v1600, 2
  %v1602 = vmax.f32 %v1600, %v1601
  %v1603 = vrot.slane %v1602, 1
  %v1604 = vmax.f32 %v1602, %v1603
  %v1605 = vmax.f32 %v1349, %v1351
  %v1606 = vmax.f32 %v1605, %v1353
  %v1607 = vmax.f32 %v1606, %v1355
  %v1608 = vrot.slane %v1607, 4
  %v1609 = vmax.f32 %v1607, %v1608
  %v1610 = vrot.slane %v1609, 2
  %v1611 = vmax.f32 %v1609, %v1610
  %v1612 = vrot.slane %v1611, 1
  %v1613 = vmax.f32 %v1611, %v1612
  %v1614 = vmax.f32 %v1356, %v1358
  %v1615 = vmax.f32 %v1614, %v1360
  %v1616 = vmax.f32 %v1615, %v1362
  %v1617 = vrot.slane %v1616, 4
  %v1618 = vmax.f32 %v1616, %v1617
  %v1619 = vrot.slane %v1618, 2
  %v1620 = vmax.f32 %v1618, %v1619
  %v1621 = vrot.slane %v1620, 1
  %v1622 = vmax.f32 %v1620, %v1621
  %v1623 = vmax.f32 %v1357, %v1359
  %v1624 = vmax.f32 %v1623, %v1361
  %v1625 = vmax.f32 %v1624, %v1363
  %v1626 = vrot.slane %v1625, 4
  %v1627 = vmax.f32 %v1625, %v1626
  %v1628 = vrot.slane %v1627, 2
  %v1629 = vmax.f32 %v1627, %v1628
  %v1630 = vrot.slane %v1629, 1
  %v1631 = vmax.f32 %v1629, %v1630
  %v1632 = vmax.f32 %v1364, %v1366
  %v1633 = vmax.f32 %v1632, %v1368
  %v1634 = vmax.f32 %v1633, %v1370
  %v1635 = vrot.slane %v1634, 4
  %v1636 = vmax.f32 %v1634, %v1635
  %v1637 = vrot.slane %v1636, 2
  %v1638 = vmax.f32 %v1636, %v1637
  %v1639 = vrot.slane %v1638, 1
  %v1640 = vmax.f32 %v1638, %v1639
  %v1641 = vmax.f32 %v1365, %v1367
  %v1642 = vmax.f32 %v1641, %v1369
  %v1643 = vmax.f32 %v1642, %v1371
  %v1644 = vrot.slane %v1643, 4
  %v1645 = vmax.f32 %v1643, %v1644
  %v1646 = vrot.slane %v1645, 2
  %v1647 = vmax.f32 %v1645, %v1646
  %v1648 = vrot.slane %v1647, 1
  %v1649 = vmax.f32 %v1647, %v1648
  %v1650 = vmax.f32 %v1372, %v1374
  %v1651 = vmax.f32 %v1650, %v1376
  %v1652 = vmax.f32 %v1651, %v1378
  %v1653 = vrot.slane %v1652, 4
  %v1654 = vmax.f32 %v1652, %v1653
  %v1655 = vrot.slane %v1654, 2
  %v1656 = vmax.f32 %v1654, %v1655
  %v1657 = vrot.slane %v1656, 1
  %v1658 = vmax.f32 %v1656, %v1657
  %v1659 = vmax.f32 %v1373, %v1375
  %v1660 = vmax.f32 %v1659, %v1377
  %v1661 = vmax.f32 %v1660, %v1379
  %v1662 = vrot.slane %v1661, 4
  %v1663 = vmax.f32 %v1661, %v1662
  %v1664 = vrot.slane %v1663, 2
  %v1665 = vmax.f32 %v1663, %v1664
  %v1666 = vrot.slane %v1665, 1
  %v1667 = vmax.f32 %v1665, %v1666
  %v1668 = vld [vmem:[%s1] sm:$0xff]
  %v1669 = vld [vmem:[%s1 + $0x8] sm:$0xff]
  %v1670 = vperm.slane %v73, 1
  %vm1671 = vcmask 64512
  %v1673 = vsel %vm1671, %v1668, 0
  %v1676 = vsel %vm1671, %v1669, 0
  %1678 = vmatpush.msra.mxu0 0.0
  %1679 = vmatpush.msra.mxu0 0.0
  %1680 = vmatpush.msra.mxu0 0.0
  %1681 = vmatpush.msra.mxu0 0.0
  %1682 = vmatpush.msra.mxu0 0.0
  %1683 = vmatpush.msra.mxu0 0.0
  %1684 = vmatpush.msra.mxu0 0.0
  %1685 = vmatpush.msra.mxu0 0.0
  %1686 = vmatpush.msra.mxu0 0.0
  %1687 = vmatpush.msra.mxu0 0.0
  %1688 = vmatpush.msra.mxu0 0.0
  %1689 = vmatpush.msra.mxu0 0.0
  %1690 = vmatpush.msra.mxu0 0.0
  %1691 = vmatpush.msra.mxu0 0.0
  %1692 = vmatpush.msra.mxu0 0.0
  %1693 = vmatpush.msra.mxu0 %v24
  %1694 = vmatmul.f32.gmra.mxu0 %v1673
  %v1695 = vpop.f32.mrf.mxu0
  %v1696 = vadd.f32 %v1670, %v1695
  %1697 = vmatmul.f32.gmra.mxu0 %v1676
  %v1698 = vpop.f32.mrf.mxu0
  %v1699 = vadd.f32 %v1670, %v1698
  %1700 = vdwg.mxu0
  %v1701 = vmax.f32 %v1696, 0.0
  %v1702 = vmax.f32 %v1699, 0.0
  %v1703 = vperm.slane %v73, 2
  %v1705 = vsel %vm641, %v1701, 0
  %v1708 = vsel %vm641, %v1702, 0
  %1710 = vmatpush.msra.mxu0 0.0
  %1711 = vmatpush.msra.mxu0 0.0
  %1712 = vmatpush.msra.mxu0 0.0
  %1713 = vmatpush.msra.mxu0 0.0
  %1714 = vmatpush.msra.mxu0 0.0
  %1715 = vmatpush.msra.mxu0 0.0
  %1716 = vmatpush.msra.mxu0 0.0
  %1717 = vmatpush.msra.mxu0 0.0
  %1718 = vmatpush.msra.mxu0 %v32
  %1719 = vmatpush.msra.mxu0 %v31
  %1720 = vmatpush.msra.mxu0 %v30
  %1721 = vmatpush.msra.mxu0 %v29
  %1722 = vmatpush.msra.mxu0 %v28
  %1723 = vmatpush.msra.mxu0 %v27
  %1724 = vmatpush.msra.mxu0 %v26
  %1725 = vmatpush.msra.mxu0 %v25
  %1726 = vmatmul.f32.gmra.mxu0 %v1705
  %v1727 = vpop.f32.mrf.mxu0
  %v1728 = vadd.f32 %v1703, %v1727
  %1729 = vmatmul.f32.gmra.mxu0 %v1708
  %v1730 = vpop.f32.mrf.mxu0
  %v1731 = vadd.f32 %v1703, %v1730
  %1732 = vdwg.mxu0
  %v1733 = vmax.f32 %v1728, 0.0
  %v1734 = vmax.f32 %v1731, 0.0
  %v1735 = vsel %vm1671, %v1668, 0.0
  %1736 = vadd.xlane.f32.xlu0 %v1735
  %v1737 = vpop.xlane.xlu0 %1736
  %v1738 = vsel %vm1671, %v1669, 0.0
  %1739 = vadd.xlane.f32.xlu0 %v1738
  %v1740 = vpop.xlane.xlu0 %1739
  %vm1741 = vcmp.eq.f32.partialorder %v1737, 0.0
  %vm1742 = vcmp.eq.f32.partialorder %v1740, 0.0
  %v1743 = vsel %vm1741, 0.0, 1.0
  %v1744 = vsel %vm1742, 0.0, 1.0
  %v1745 = vld [vmem:[%s2] sm:$0xff]
  %v1746 = vld [vmem:[%s2 + $0x8] sm:$0xff]
  %v1747 = vld [vmem:[%s2 + $0x10] sm:$0xff]
  %vm1780 = vcmask 1041409
  %v1781 = vsel %vm1780, %v1406, %v1388
  %vm1782 = vcmask 1042434
  %v1783 = vsel %vm1782, %v1424, %v1781
  %vm1784 = vcmask 1043459
  %v1785 = vsel %vm1784, %v1442, %v1783
  %vm1786 = vcmask 1044484
  %v1787 = vsel %vm1786, %v1460, %v1785
  %vm1788 = vcmask 1045509
  %v1789 = vsel %vm1788, %v1478, %v1787
  %vm1790 = vcmask 1046534
  %v1791 = vsel %vm1790, %v1496, %v1789
  %vm1792 = vcmask 1047559
  %v1793 = vsel %vm1792, %v1514, %v1791
  %v1794 = vsel %vm1780, %v1415, %v1397
  %v1795 = vsel %vm1782, %v1433, %v1794
  %v1796 = vsel %vm1784, %v1451, %v1795
  %v1797 = vsel %vm1786, %v1469, %v1796
  %v1798 = vsel %vm1788, %v1487, %v1797
  %v1799 = vsel %vm1790, %v1505, %v1798
  %v1800 = vsel %vm1792, %v1523, %v1799
  %v1801 = vsel %vm1780, %v1550, %v1532
  %v1802 = vsel %vm1782, %v1568, %v1801
  %v1803 = vsel %vm1784, %v1586, %v1802
  %v1804 = vsel %vm1786, %v1604, %v1803
  %v1805 = vsel %vm1788, %v1622, %v1804
  %v1806 = vsel %vm1790, %v1640, %v1805
  %v1807 = vsel %vm1792, %v1658, %v1806
  %v1808 = vsel %vm1780, %v1559, %v1541
  %v1809 = vsel %vm1782, %v1577, %v1808
  %v1810 = vsel %vm1784, %v1595, %v1809
  %v1811 = vsel %vm1786, %v1613, %v1810
  %v1812 = vsel %vm1788, %v1631, %v1811
  %v1813 = vsel %vm1790, %v1649, %v1812
  %v1814 = vsel %vm1792, %v1667, %v1813
  %v1819 = vadd.f32 %v1793, %v1745
  %v1820 = vadd.f32 %v1800, %v1746
  %v1821 = vadd.f32 %v1733, %v1747
  %v1822 = vadd.f32 %v1807, %v1745
  %v1823 = vadd.f32 %v1814, %v1746
  %v1824 = vadd.f32 %v1734, %v1747
  %v1825 = vmul.f32 %v1819, %v1743
  %v1826 = vmul.f32 %v1820, %v1743
  %v1827 = vmul.f32 %v1821, %v1743
  %v1828 = vmul.f32 %v1822, %v1744
  %v1829 = vmul.f32 %v1823, %v1744
  %v1830 = vmul.f32 %v1824, %v1744
  %v1831 = vperm.slane %v73, 3
  %v1833 = vsel %vm641, %v1827, 0
  %v1836 = vsel %vm641, %v1830, 0
  %1838 = vmatpush.msra.mxu0 %v48
  %1839 = vmatpush.msra.mxu0 %v47
  %1840 = vmatpush.msra.mxu0 %v46
  %1841 = vmatpush.msra.mxu0 %v45
  %1842 = vmatpush.msra.mxu0 %v44
  %1843 = vmatpush.msra.mxu0 %v43
  %1844 = vmatpush.msra.mxu0 %v42
  %1845 = vmatpush.msra.mxu0 %v41
  %1846 = vmatpush.msra.mxu0 %v40
  %1847 = vmatpush.msra.mxu0 %v39
  %1848 = vmatpush.msra.mxu0 %v38
  %1849 = vmatpush.msra.mxu0 %v37
  %1850 = vmatpush.msra.mxu0 %v36
  %1851 = vmatpush.msra.mxu0 %v35
  %1852 = vmatpush.msra.mxu0 %v34
  %1853 = vmatpush.msra.mxu0 %v33
  %1854 = vmatmul.f32.gmra.mxu0 %v1825
  %v1855 = vpop.f32.mrf.mxu0
  %v1856 = vadd.f32 %v1831, %v1855
  %1857 = vmatmul.f32.gmra.mxu0 %v1828
  %v1858 = vpop.f32.mrf.mxu0
  %v1859 = vadd.f32 %v1831, %v1858
  %1860 = vdwg.mxu0
  %1861 = vmatpush.msra.mxu0 %v64
  %1862 = vmatpush.msra.mxu0 %v63
  %1863 = vmatpush.msra.mxu0 %v62
  %1864 = vmatpush.msra.mxu0 %v61
  %1865 = vmatpush.msra.mxu0 %v60
  %1866 = vmatpush.msra.mxu0 %v59
  %1867 = vmatpush.msra.mxu0 %v58
  %1868 = vmatpush.msra.mxu0 %v57
  %1869 = vmatpush.msra.mxu0 %v56
  %1870 = vmatpush.msra.mxu0 %v55
  %1871 = vmatpush.msra.mxu0 %v54
  %1872 = vmatpush.msra.mxu0 %v53
  %1873 = vmatpush.msra.mxu0 %v52
  %1874 = vmatpush.msra.mxu0 %v51
  %1875 = vmatpush.msra.mxu0 %v50
  %1876 = vmatpush.msra.mxu0 %v49
  %1877 = vmatmul.f32.gmra.mxu0 %v1826
  %v1878 = vpop.f32.mrf.mxu0
  %v1879 = vadd.f32 %v1856, %v1878
  %1880 = vmatmul.f32.gmra.mxu0 %v1829
  %v1881 = vpop.f32.mrf.mxu0
  %v1882 = vadd.f32 %v1859, %v1881
  %1883 = vdwg.mxu0
  %1884 = vmatpush.msra.mxu0 0.0
  %1885 = vmatpush.msra.mxu0 0.0
  %1886 = vmatpush.msra.mxu0 0.0
  %1887 = vmatpush.msra.mxu0 0.0
  %1888 = vmatpush.msra.mxu0 0.0
  %1889 = vmatpush.msra.mxu0 0.0
  %1890 = vmatpush.msra.mxu0 0.0
  %1891 = vmatpush.msra.mxu0 0.0
  %1892 = vmatpush.msra.mxu0 %v72
  %1893 = vmatpush.msra.mxu0 %v71
  %1894 = vmatpush.msra.mxu0 %v70
  %1895 = vmatpush.msra.mxu0 %v69
  %1896 = vmatpush.msra.mxu0 %v68
  %1897 = vmatpush.msra.mxu0 %v67
  %1898 = vmatpush.msra.mxu0 %v66
  %1899 = vmatpush.msra.mxu0 %v65
  %1900 = vmatmul.f32.gmra.mxu0 %v1833
  %v1901 = vpop.f32.mrf.mxu0
  %v1902 = vadd.f32 %v1879, %v1901
  %1903 = vmatmul.f32.gmra.mxu0 %v1836
  %v1904 = vpop.f32.mrf.mxu0
  %v1905 = vadd.f32 %v1882, %v1904
  %1906 = vdwg.mxu0
  %v1907 = vmax.f32 %v1902, 0.0
  %v1908 = vmax.f32 %v1905, 0.0
  %v1909 = vperm.slane %v100, 0
  %v1911 = vsel %vm641, %v1907, 0
  %v1914 = vsel %vm641, %v1908, 0
  %1916 = vmatpush.msra.mxu0 0.0
  %1917 = vmatpush.msra.mxu0 0.0
  %1918 = vmatpush.msra.mxu0 0.0
  %1919 = vmatpush.msra.mxu0 0.0
  %1920 = vmatpush.msra.mxu0 0.0
  %1921 = vmatpush.msra.mxu0 0.0
  %1922 = vmatpush.msra.mxu0 0.0
  %1923 = vmatpush.msra.mxu0 0.0
  %1924 = vmatpush.msra.mxu0 %v99
  %1925 = vmatpush.msra.mxu0 %v98
  %1926 = vmatpush.msra.mxu0 %v97
  %1927 = vmatpush.msra.mxu0 %v96
  %1928 = vmatpush.msra.mxu0 %v95
  %1929 = vmatpush.msra.mxu0 %v94
  %1930 = vmatpush.msra.mxu0 %v93
  %1931 = vmatpush.msra.mxu0 %v92
  %1932 = vmatmul.f32.gmra.mxu0 %v1911
  %v1933 = vpop.f32.mrf.mxu0
  %v1934 = vadd.f32 %v1909, %v1933
  %1935 = vmatmul.f32.gmra.mxu0 %v1914
  %v1936 = vpop.f32.mrf.mxu0
  %v1937 = vadd.f32 %v1909, %v1936
  %1938 = vdwg.mxu0
  %v1939 = vrot.slane %v1825, 4
  %v1940 = vmax.f32 %v1825, %v1939
  %v1941 = vrot.slane %v1940, 2
  %v1942 = vmax.f32 %v1940, %v1941
  %v1943 = vrot.slane %v1942, 1
  %v1944 = vmax.f32 %v1942, %v1943
  %v1945 = vrot.slane %v1826, 4
  %v1946 = vmax.f32 %v1826, %v1945
  %v1947 = vrot.slane %v1946, 2
  %v1948 = vmax.f32 %v1946, %v1947
  %v1949 = vrot.slane %v1948, 1
  %v1950 = vmax.f32 %v1948, %v1949
  %v1951 = vsel %vm641, %v1827, -inf
  %v1952 = vrot.slane %v1951, 4
  %v1953 = vmax.f32 %v1951, %v1952
  %v1954 = vrot.slane %v1953, 2
  %v1955 = vmax.f32 %v1953, %v1954
  %v1956 = vrot.slane %v1955, 1
  %v1957 = vmax.f32 %v1955, %v1956
  %v1958 = vrot.slane %v1828, 4
  %v1959 = vmax.f32 %v1828, %v1958
  %v1960 = vrot.slane %v1959, 2
  %v1961 = vmax.f32 %v1959, %v1960
  %v1962 = vrot.slane %v1961, 1
  %v1963 = vmax.f32 %v1961, %v1962
  %v1964 = vrot.slane %v1829, 4
  %v1965 = vmax.f32 %v1829, %v1964
  %v1966 = vrot.slane %v1965, 2
  %v1967 = vmax.f32 %v1965, %v1966
  %v1968 = vrot.slane %v1967, 1
  %v1969 = vmax.f32 %v1967, %v1968
  %v1970 = vsel %vm641, %v1830, -inf
  %v1971 = vrot.slane %v1970, 4
  %v1972 = vmax.f32 %v1970, %v1971
  %v1973 = vrot.slane %v1972, 2
  %v1974 = vmax.f32 %v1972, %v1973
  %v1975 = vrot.slane %v1974, 1
  %v1976 = vmax.f32 %v1974, %v1975
  %v1983 = vsel %vm1780, %v1963, %v1944
  %v1984 = vsel %vm1780, %v1969, %v1950
  %v1985 = vsel %vm1780, %v1976, %v1957
  %v1988 = vsel %vm641, %v1985, 0
  %1990 = vmatpush.msra.mxu0 %v48
  %1991 = vmatpush.msra.mxu0 %v47
  %1992 = vmatpush.msra.mxu0 %v46
  %1993 = vmatpush.msra.mxu0 %v45
  %1994 = vmatpush.msra.mxu0 %v44
  %1995 = vmatpush.msra.mxu0 %v43
  %1996 = vmatpush.msra.mxu0 %v42
  %1997 = vmatpush.msra.mxu0 %v41
  %1998 = vmatpush.msra.mxu0 %v40
  %1999 = vmatpush.msra.mxu0 %v39
  %2000 = vmatpush.msra.mxu0 %v38
  %2001 = vmatpush.msra.mxu0 %v37
  %2002 = vmatpush.msra.mxu0 %v36
  %2003 = vmatpush.msra.mxu0 %v35
  %2004 = vmatpush.msra.mxu0 %v34
  %2005 = vmatpush.msra.mxu0 %v33
  %2006 = vmatmul.f32.gmra.mxu0 %v1983
  %v2007 = vpop.f32.mrf.mxu0
  %v2008 = vadd.f32 %v1831, %v2007
  %2009 = vdwg.mxu0
  %2010 = vmatpush.msra.mxu0 %v64
  %2011 = vmatpush.msra.mxu0 %v63
  %2012 = vmatpush.msra.mxu0 %v62
  %2013 = vmatpush.msra.mxu0 %v61
  %2014 = vmatpush.msra.mxu0 %v60
  %2015 = vmatpush.msra.mxu0 %v59
  %2016 = vmatpush.msra.mxu0 %v58
  %2017 = vmatpush.msra.mxu0 %v57
  %2018 = vmatpush.msra.mxu0 %v56
  %2019 = vmatpush.msra.mxu0 %v55
  %2020 = vmatpush.msra.mxu0 %v54
  %2021 = vmatpush.msra.mxu0 %v53
  %2022 = vmatpush.msra.mxu0 %v52
  %2023 = vmatpush.msra.mxu0 %v51
  %2024 = vmatpush.msra.mxu0 %v50
  %2025 = vmatpush.msra.mxu0 %v49
  %2026 = vmatmul.f32.gmra.mxu0 %v1984
  %v2027 = vpop.f32.mrf.mxu0
  %v2028 = vadd.f32 %v2008, %v2027
  %2029 = vdwg.mxu0
  %2030 = vmatpush.msra.mxu0 0.0
  %2031 = vmatpush.msra.mxu0 0.0
  %2032 = vmatpush.msra.mxu0 0.0
  %2033 = vmatpush.msra.mxu0 0.0
  %2034 = vmatpush.msra.mxu0 0.0
  %2035 = vmatpush.msra.mxu0 0.0
  %2036 = vmatpush.msra.mxu0 0.0
  %2037 = vmatpush.msra.mxu0 0.0
  %2038 = vmatpush.msra.mxu0 %v72
  %2039 = vmatpush.msra.mxu0 %v71
  %2040 = vmatpush.msra.mxu0 %v70
  %2041 = vmatpush.msra.mxu0 %v69
  %2042 = vmatpush.msra.mxu0 %v68
  %2043 = vmatpush.msra.mxu0 %v67
  %2044 = vmatpush.msra.mxu0 %v66
  %2045 = vmatpush.msra.mxu0 %v65
  %2046 = vmatmul.f32.gmra.mxu0 %v1988
  %v2047 = vpop.f32.mrf.mxu0
  %v2048 = vadd.f32 %v2028, %v2047
  %2049 = vdwg.mxu0
  %v2050 = vmax.f32 %v2048, 0.0
  %v2052 = vsel %vm641, %v2050, 0
  %2054 = vmatpush.msra.mxu0 0.0
  %2055 = vmatpush.msra.mxu0 0.0
  %2056 = vmatpush.msra.mxu0 0.0
  %2057 = vmatpush.msra.mxu0 0.0
  %2058 = vmatpush.msra.mxu0 0.0
  %2059 = vmatpush.msra.mxu0 0.0
  %2060 = vmatpush.msra.mxu0 0.0
  %2061 = vmatpush.msra.mxu0 0.0
  %2062 = vmatpush.msra.mxu0 %v99
  %2063 = vmatpush.msra.mxu0 %v98
  %2064 = vmatpush.msra.mxu0 %v97
  %2065 = vmatpush.msra.mxu0 %v96
  %2066 = vmatpush.msra.mxu0 %v95
  %2067 = vmatpush.msra.mxu0 %v94
  %2068 = vmatpush.msra.mxu0 %v93
  %2069 = vmatpush.msra.mxu0 %v92
  %2070 = vmatmul.f32.gmra.mxu0 %v2052
  %v2071 = vpop.f32.mrf.mxu0
  %v2072 = vadd.f32 %v1909, %v2071
  %2073 = vdwg.mxu0
  %v2075 = vrot.slane %v2072, 1
  %v2076 = vperm.slane %v2072, 0
  %v2077 = vperm.slane %v2075, 0
  %v2080 = vlaneseq
  %v2081 = vand.u32 %v2080, 127
  %vm2082 = vcmp.eq.s32.totalorder %v2081, 7
  %v2083 = vxor.u32 %v1934, 2147483648
  %v2084 = vxor.u32 %v1937, 2147483648
  %v2085 = vmul.f32 %v2083, 1.442695
  %v2086 = vpow.pop %v2085
  %v2087 = vmul.f32 %v2084, 1.442695
  %v2088 = vpow.pop %v2087
  %v2089 = vadd.f32 %v2086, 1.0
  %v2090 = vadd.f32 %v2088, 1.0
  %v2091 = vrcp.pop %v2089
  %v2092 = vmul.f32 %v2089, %v2091
  %v2093 = vsub.f32 1.0, %v2092
  %v2094 = vmul.f32 %v2091, %v2093
  %v2095 = vadd.f32 %v2091, %v2094
  %vm2096 = vweird.f32 %v2089
  %vm2097 = vweird.f32 %v2091
  %vm2098 = vmor %vm2096, %vm2097
  %v2099 = vsel %vm2098, %v2091, %v2095
  %v2100 = vand.u32 2147483647, %v2089
  %vm2101 = vcmp.eq.f32.partialorder %v2100, 8.507059e+37
  %v2102 = vand.u32 %v2089, 2147483648
  %v2103 = vor.u32 1.1754944e-38, %v2102
  %v2104 = vsel %vm2101, %v2103, %v2099
  %v2105 = vmul.f32 1.0, %v2104
  %v2106 = vrcp.pop %v2090
  %v2107 = vmul.f32 %v2090, %v2106
  %v2108 = vsub.f32 1.0, %v2107
  %v2109 = vmul.f32 %v2106, %v2108
  %v2110 = vadd.f32 %v2106, %v2109
  %vm2111 = vweird.f32 %v2090
  %vm2112 = vweird.f32 %v2106
  %vm2113 = vmor %vm2111, %vm2112
  %v2114 = vsel %vm2113, %v2106, %v2110
  %v2115 = vand.u32 2147483647, %v2090
  %vm2116 = vcmp.eq.f32.partialorder %v2115, 8.507059e+37
  %v2117 = vand.u32 %v2090, 2147483648
  %v2118 = vor.u32 1.1754944e-38, %v2117
  %v2119 = vsel %vm2116, %v2118, %v2114
  %v2120 = vmul.f32 1.0, %v2119
  %v2121 = vsel %vm2082, %v2105, %v1934
  %v2122 = vsel %vm2082, %v2120, %v1937
  %vm2123 = vcmp.ge.s32.totalorder %v2081, 3
  %vm2124 = vcmp.lt.s32.totalorder %v2081, 6
  %vm2125 = vmand %vm2123, %vm2124
  %v2126 = vsel %vm2125, %v2076, %v2121
  %v2127 = vsel %vm2125, %v2077, %v2122
  %2128 = vst [vmem:[%s6] sm:$0xff] %v2126
  %2129 = vst [vmem:[%s6 + $0x8] sm:$0xff] %v2127
  // Predicated region
  $region26: #{pc_track_net_forward.1} parent=0 // pred_check
    _
  $region27: #{pc_track_net_forward.1} parent=0 // pred_check_branch
    %2131 = sbr.rel (0) target = $region29
  $region28: #{pc_track_net_forward.1} parent=0 // pred_region
    _
  $region29: #{pc_track_net_forward.1} parent=0 // pred_fallthru
    _
  // Predicated region
  $region30: #{pc_track_net_forward.1} parent=0 // pred_check
    _
  $region31: #{pc_track_net_forward.1} parent=0 // pred_check_branch
    %2133 = sbr.rel (0) target = $region33
  $region32: #{pc_track_net_forward.1} parent=0 // pred_region
    _
  $region33: #{pc_track_net_forward.1} parent=0 // pred_fallthru
    _

</llo_original>
